<compile_context>
chip_gen: v5e
topology: v5e:2x2
jax: 0.10.0
libtpu: 0.0.40
codegen_flags: <defaults>
</compile_context>

<pallas_src>
import math

import jax
import jax.numpy as jnp
from jax.experimental import pallas as pl
from jax.experimental.pallas import tpu as pltpu

# ---------------- small synthetic BERT config ----------------
VOCAB = 50
HIDDEN = 32
N_LAYERS = 2
N_HEADS = 2
HEAD_DIM = HIDDEN // N_HEADS
INTER = 64
MAX_POS = 16
TYPE_VOCAB = 2
PREFIX_SIZE = 1          # PrefixBert default
PREFIX_AGGR = "concat"   # PrefixBert default
NUM_CLASSES = 2
LN_EPS = 1e-12
MASK_NEG = -10000.0      # HF BERT additive-mask value

MATMUL_DTYPE = jnp.bfloat16   # MXU operand dtype (set to jnp.float32 for bit-exact f32 math)


# ---------------- in-kernel helpers (f32 elementwise math) ----------------
def _layernorm(x, g, b):
    mu = jnp.mean(x, axis=-1, keepdims=True)
    var = jnp.mean(jnp.square(x - mu), axis=-1, keepdims=True)
    return (x - mu) * jax.lax.rsqrt(var + LN_EPS) * g + b


def _gelu(x):
    # TODO(synk): HF BertConfig default act is exact erf-GELU; tanh approximation used here.
    return 0.5 * x * (1.0 + jnp.tanh(0.7978845608028654 * (x + 0.044715 * x * x * x)))


def _mxu_dot(a, b):
    # bf16 operands, f32 accumulation.
    return jnp.dot(a.astype(MATMUL_DTYPE), b.astype(MATMUL_DTYPE),
                   preferred_element_type=jnp.float32)


def _mxu_qkT(q, k):
    # q @ k^T without an explicit transpose (contract on the feature dim).
    return jnp.einsum("sd,td->st", q.astype(MATMUL_DTYPE), k.astype(MATMUL_DTYPE),
                      preferred_element_type=jnp.float32)


# ---------------- fused forward kernel (one batch element per grid step) ----------------
def prefix_bert_kernel(emb_ref, mask_ref, embln_ref,
                       wqkv_ref, bqkv_ref, wao_ref,
                       wffn1_ref, bffn1_ref, wffn2_ref,
                       hslab_ref, clsw_ref, clsb_ref,
                       o_ref):
    H = HIDDEN
    scale = 1.0 / math.sqrt(HEAD_DIM)

    x = emb_ref[0]                                    # (S, H) embedding sum for this batch elem
    mask = mask_ref[0]                                # (1, S) additive attention mask
    h = _layernorm(x, embln_ref[0:1, :], embln_ref[1:2, :])

    # Static unroll over layers: everything (weights + activations) is VMEM-resident
    # and tiny, so full LLO scheduling visibility beats a fori_loop here.
    for li in range(N_LAYERS):
        qkv = _mxu_dot(h, wqkv_ref[li]) + bqkv_ref[li]      # (S, 3H) fused Q/K/V projection
        slab = hslab_ref[li]                                # (6, H): [b_ao, ln1g, ln1b, b_fo, ln2g, ln2b]

        ctx_heads = []
        for hd in range(N_HEADS):                           # static unroll over heads
            q = qkv[:, hd * HEAD_DIM:(hd + 1) * HEAD_DIM]
            k = qkv[:, H + hd * HEAD_DIM:H + (hd + 1) * HEAD_DIM]
            v = qkv[:, 2 * H + hd * HEAD_DIM:2 * H + (hd + 1) * HEAD_DIM]
            s = _mxu_qkT(q, k) * scale + mask               # (S, S); mask broadcasts over query rows
            s = s - jnp.max(s, axis=-1, keepdims=True)
            p = jnp.exp(s)
            p = p * pl.reciprocal(jnp.sum(p, axis=-1, keepdims=True), approx=True)
            ctx_heads.append(_mxu_dot(p, v))                # (S, HEAD_DIM)
        ctx = jnp.concatenate(ctx_heads, axis=-1)           # (S, H) lane-concat of head contexts

        attn = _mxu_dot(ctx, wao_ref[li]) + slab[0:1, :]    # single (S,H)@(H,H) output proj
        h1 = _layernorm(attn + h, slab[1:2, :], slab[2:3, :])
        inter = _gelu(_mxu_dot(h1, wffn1_ref[li]) + bffn1_ref[li])
        ffn = _mxu_dot(inter, wffn2_ref[li]) + slab[3:4, :]
        h = _layernorm(ffn + h1, slab[4:5, :], slab[5:6, :])

    # Classifier over [prefix tokens ++ CLS] hidden states (prefix_aggr == 'concat').
    # The flattened-concat linear is expressed as a sum of per-token dots so no
    # sublane->lane reshape is needed inside the kernel.
    logits = clsb_ref[...]                                  # (1, NUM_CLASSES)
    for t in range(PREFIX_SIZE + 1):
        logits = logits + _mxu_dot(h[t:t + 1, :], clsw_ref[t])
    m = jnp.max(logits, axis=-1, keepdims=True)
    lse = jnp.log(jnp.sum(jnp.exp(logits - m), axis=-1, keepdims=True)) + m
    o_ref[0] = logits - lse                                 # LogSoftmax(dim=-1)


def _rep_spec(shape):
    # Weight arrays: full-array block, same block for every grid step (fetched once).
    n = len(shape)
    return pl.BlockSpec(shape, lambda b: (0,) * n)


# ---------------- parameters (deterministic synthetic init, stacked layout) ----------------
def init_params(key):
    def nrm(k, shape):
        return 0.02 * jax.random.normal(k, shape, dtype=jnp.float32)

    keys = jax.random.split(key, 8 + N_LAYERS)
    params = {
        "word_emb": nrm(keys[0], (VOCAB, HIDDEN)),
        "pos_emb": nrm(keys[1], (MAX_POS, HIDDEN)),
        "type_emb": nrm(keys[2], (TYPE_VOCAB, HIDDEN)),
        "prefix_emb": nrm(keys[3], (PREFIX_SIZE, HIDDEN)),
        "emb_ln": jnp.concatenate([jnp.ones((1, HIDDEN), jnp.float32),
                                   jnp.zeros((1, HIDDEN), jnp.float32)], axis=0),   # (2, H)
        # classifier weight stored as (P+1, H, C): equivalent to a ((P+1)*H, C) linear
        # acting on the flattened [prefix..CLS] hidden states.
        "cls_w": nrm(keys[4], (PREFIX_SIZE + 1, HIDDEN, NUM_CLASSES)),
        "cls_b": nrm(keys[5], (1, NUM_CLASSES)),
    }

    wqkv, bqkv, wao, wffn1, bffn1, wffn2, hslab = [], [], [], [], [], [], []
    for li in range(N_LAYERS):
        lk = jax.random.split(keys[8 + li], 12)
        wq = nrm(lk[0], (HIDDEN, HIDDEN))      # (in, out) so y = x @ W + b == nn.Linear
        wk = nrm(lk[1], (HIDDEN, HIDDEN))
        wv = nrm(lk[2], (HIDDEN, HIDDEN))
        wqkv.append(jnp.concatenate([wq, wk, wv], axis=1))                       # (H, 3H)
        bqkv.append(jnp.concatenate([nrm(lk[3], (1, HIDDEN)),
                                     nrm(lk[4], (1, HIDDEN)),
                                     nrm(lk[5], (1, HIDDEN))], axis=1))          # (1, 3H)
        wao.append(nrm(lk[6], (HIDDEN, HIDDEN)))                                 # (H, H)
        wffn1.append(nrm(lk[7], (HIDDEN, INTER)))
        bffn1.append(nrm(lk[8], (1, INTER)))
        wffn2.append(nrm(lk[9], (INTER, HIDDEN)))
        hslab.append(jnp.concatenate([
            nrm(lk[10], (1, HIDDEN)),                  # attention output bias
            jnp.ones((1, HIDDEN), jnp.float32),        # ln1 gamma
            jnp.zeros((1, HIDDEN), jnp.float32),       # ln1 beta
            nrm(lk[11], (1, HIDDEN)),                  # ffn output bias
            jnp.ones((1, HIDDEN), jnp.float32),        # ln2 gamma
            jnp.zeros((1, HIDDEN), jnp.float32),       # ln2 beta
        ], axis=0))                                    # (6, H)

    params.update({
        "wqkv": jnp.stack(wqkv),        # (L, H, 3H)
        "bqkv": jnp.stack(bqkv),        # (L, 1, 3H)
        "w_attn_out": jnp.stack(wao),   # (L, H, H)
        "w_ffn_in": jnp.stack(wffn1),   # (L, H, INTER)
        "b_ffn_in": jnp.stack(bffn1),   # (L, 1, INTER)
        "w_ffn_out": jnp.stack(wffn2),  # (L, INTER, H)
        "hslab": jnp.stack(hslab),      # (L, 6, H)
    })
    return params


# ---------------- forward pass (mirrors PrefixBert.forward) ----------------
@jax.jit
def prefix_bert_forward(params, input_ids, attention_mask, token_type_ids):
    B, L = input_ids.shape
    trunc_L = MAX_POS - PREFIX_SIZE

    # ---- glue: prefix embedding, word-embedding gather, mask / token-type concat ----
    prefix_emb = jnp.broadcast_to(params["prefix_emb"][None], (B, PREFIX_SIZE, HIDDEN))
    word_emb = jnp.take(params["word_emb"], input_ids[:, :trunc_L], axis=0)      # (B, L', H)
    word_emb = jnp.concatenate([prefix_emb, word_emb], axis=1)                   # (B, S, H)
    S = word_emb.shape[1]

    attn = jnp.concatenate(
        [jnp.ones((B, PREFIX_SIZE), attention_mask.dtype), attention_mask[:, :trunc_L]], axis=1)
    tt = jnp.concatenate(
        [jnp.zeros((B, PREFIX_SIZE), token_type_ids.dtype), token_type_ids[:, :trunc_L]], axis=1)

    pos_emb = params["pos_emb"][:S]                                              # (S, H)
    type_emb = jnp.take(params["type_emb"], tt, axis=0)                          # (B, S, H)
    emb_sum = word_emb + pos_emb[None] + type_emb                                # (B, S, H)
    add_mask = ((1.0 - attn.astype(jnp.float32)) * MASK_NEG)[:, None, :]         # (B, 1, S)

    # ---- single fused Pallas call: embed-LN + all encoder layers + classifier ----
    in_specs = [
        pl.BlockSpec((1, S, HIDDEN), lambda b: (b, 0, 0)),   # emb_sum (per-batch block)
        pl.BlockSpec((1, 1, S), lambda b: (b, 0, 0)),        # additive mask
        _rep_spec((2, HIDDEN)),                              # embedding LN params
        _rep_spec((N_LAYERS, HIDDEN, 3 * HIDDEN)),           # fused QKV weights
        _rep_spec((N_LAYERS, 1, 3 * HIDDEN)),                # fused QKV biases
        _rep_spec((N_LAYERS, HIDDEN, HIDDEN)),               # attention output proj
        _rep_spec((N_LAYERS, HIDDEN, INTER)),                # FFN in
        _rep_spec((N_LAYERS, 1, INTER)),                     # FFN in bias
        _rep_spec((N_LAYERS, INTER, HIDDEN)),                # FFN out
        _rep_spec((N_LAYERS, 6, HIDDEN)),                    # per-layer bias/LN slab
        _rep_spec((PREFIX_SIZE + 1, HIDDEN, NUM_CLASSES)),   # classifier weight
        _rep_spec((1, NUM_CLASSES)),                         # classifier bias
    ]
    out = pl.pallas_call(
        prefix_bert_kernel,
        out_shape=jax.ShapeDtypeStruct((B, 1, NUM_CLASSES), jnp.float32),
        grid=(B,),
        in_specs=in_specs,
        out_specs=pl.BlockSpec((1, 1, NUM_CLASSES), lambda b: (b, 0, 0)),
        compiler_params=pltpu.CompilerParams(
            dimension_semantics=("parallel",)),              # batch -> TensorCores on v7x
    )(emb_sum, add_mask, params["emb_ln"],
      params["wqkv"], params["bqkv"], params["w_attn_out"],
      params["w_ffn_in"], params["b_ffn_in"], params["w_ffn_out"],
      params["hslab"], params["cls_w"], params["cls_b"])

    return out.reshape(B, NUM_CLASSES)


if __name__ == "__main__":
    B, L = 2, 8
    key = jax.random.PRNGKey(0)
    kp, ki = jax.random.split(key)
    params = init_params(kp)

    input_ids = jax.random.randint(ki, (B, L), 0, VOCAB, dtype=jnp.int32)
    attention_mask = jnp.concatenate(
        [jnp.ones((B, L - 2), jnp.int32), jnp.zeros((B, 2), jnp.int32)], axis=1)
    token_type_ids = jnp.zeros((B, L), jnp.int32)

    out = prefix_bert_forward(params, input_ids, attention_mask, token_type_ids)
    out = jax.block_until_ready(out)

    assert out.shape == (B, NUM_CLASSES)
    assert bool(jnp.all(jnp.isfinite(out)))
    print("KERNEL_OK")
</pallas_src>

<mosaic_0001>
module attributes {stable_mosaic.version = 11 : i64} {
  func.func @prefix_bert_kernel(%arg0: i32, %arg1: memref<1x9x32xf32, #tpu.memory_space<vmem>>, %arg2: memref<1x1x9xf32, #tpu.memory_space<vmem>>, %arg3: memref<2x32xf32, #tpu.memory_space<vmem>>, %arg4: memref<2x32x96xf32, #tpu.memory_space<vmem>>, %arg5: memref<2x1x96xf32, #tpu.memory_space<vmem>>, %arg6: memref<2x32x32xf32, #tpu.memory_space<vmem>>, %arg7: memref<2x32x64xf32, #tpu.memory_space<vmem>>, %arg8: memref<2x1x64xf32, #tpu.memory_space<vmem>>, %arg9: memref<2x64x32xf32, #tpu.memory_space<vmem>>, %arg10: memref<2x6x32xf32, #tpu.memory_space<vmem>>, %arg11: memref<2x32x2xf32, #tpu.memory_space<vmem>>, %arg12: memref<1x2xf32, #tpu.memory_space<vmem>>, %arg13: memref<1x1x2xf32, #tpu.memory_space<vmem>>) attributes {dimension_semantics = [#tpu.dimension_semantics<parallel>], iteration_bounds = array<i64: 2>, scalar_prefetch = 0 : i64, scratch_operands = 0 : i64, tpu.core_type = #tpu.core_type<tc>, window_params = [{transform_indices = @transform_0, window_bounds = array<i64: 1, 9, 32>}, {transform_indices = @transform_1, window_bounds = array<i64: 1, 1, 9>}, {pipeline_mode = #tpu.pipeline_mode<synchronous>, transform_indices = @transform_2, window_bounds = array<i64: 2, 32>}, {pipeline_mode = #tpu.pipeline_mode<synchronous>, transform_indices = @transform_3, window_bounds = array<i64: 2, 32, 96>}, {pipeline_mode = #tpu.pipeline_mode<synchronous>, transform_indices = @transform_4, window_bounds = array<i64: 2, 1, 96>}, {pipeline_mode = #tpu.pipeline_mode<synchronous>, transform_indices = @transform_5, window_bounds = array<i64: 2, 32, 32>}, {pipeline_mode = #tpu.pipeline_mode<synchronous>, transform_indices = @transform_6, window_bounds = array<i64: 2, 32, 64>}, {pipeline_mode = #tpu.pipeline_mode<synchronous>, transform_indices = @transform_7, window_bounds = array<i64: 2, 1, 64>}, {pipeline_mode = #tpu.pipeline_mode<synchronous>, transform_indices = @transform_8, window_bounds = array<i64: 2, 64, 32>}, {pipeline_mode = #tpu.pipeline_mode<synchronous>, transform_indices = @transform_9, window_bounds = array<i64: 2, 6, 32>}, {pipeline_mode = #tpu.pipeline_mode<synchronous>, transform_indices = @transform_10, window_bounds = array<i64: 2, 32, 2>}, {pipeline_mode = #tpu.pipeline_mode<synchronous>, transform_indices = @transform_11, window_bounds = array<i64: 1, 2>}, {transform_indices = @transform_12, window_bounds = array<i64: 1, 1, 2>}]} {
    %c0 = arith.constant 0 : index
    %c0_0 = arith.constant 0 : index
    %c0_1 = arith.constant 0 : index
    %0 = vector.load %arg1[%c0, %c0_0, %c0_1] : memref<1x9x32xf32, #tpu.memory_space<vmem>>, vector<1x9x32xf32>
    %1 = vector.shape_cast %0 : vector<1x9x32xf32> to vector<9x32xf32>
    %c0_2 = arith.constant 0 : index
    %c0_3 = arith.constant 0 : index
    %c0_4 = arith.constant 0 : index
    %2 = vector.load %arg2[%c0_2, %c0_3, %c0_4] : memref<1x1x9xf32, #tpu.memory_space<vmem>>, vector<1x1x9xf32>
    %3 = vector.shape_cast %2 : vector<1x1x9xf32> to vector<1x9xf32>
    %c0_5 = arith.constant 0 : index
    %c0_6 = arith.constant 0 : index
    %4 = vector.load %arg3[%c0_5, %c0_6] : memref<2x32xf32, #tpu.memory_space<vmem>>, vector<1x32xf32>
    %c1 = arith.constant 1 : index
    %c0_7 = arith.constant 0 : index
    %5 = vector.load %arg3[%c1, %c0_7] : memref<2x32xf32, #tpu.memory_space<vmem>>, vector<1x32xf32>
    %cst = arith.constant dense<0.000000e+00> : vector<9xf32>
    %6 = vector.multi_reduction <add>, %1, %cst [1] : vector<9x32xf32> to vector<9xf32>
    %7 = vector.shape_cast %6 : vector<9xf32> to vector<9x1xf32>
    %cst_8 = arith.constant 3.200000e+01 : f32
    %8 = vector.broadcast %cst_8 : f32 to vector<9x1xf32>
    %9 = arith.divf %7, %8 : vector<9x1xf32>
    %10 = vector.broadcast %9 : vector<9x1xf32> to vector<9x32xf32>
    %11 = arith.subf %1, %10 : vector<9x32xf32>
    %12 = arith.mulf %11, %11 : vector<9x32xf32>
    %cst_9 = arith.constant dense<0.000000e+00> : vector<9xf32>
    %13 = vector.multi_reduction <add>, %12, %cst_9 [1] : vector<9x32xf32> to vector<9xf32>
    %14 = vector.shape_cast %13 : vector<9xf32> to vector<9x1xf32>
    %cst_10 = arith.constant 3.200000e+01 : f32
    %15 = vector.broadcast %cst_10 : f32 to vector<9x1xf32>
    %16 = arith.divf %14, %15 : vector<9x1xf32>
    %17 = vector.broadcast %9 : vector<9x1xf32> to vector<9x32xf32>
    %18 = arith.subf %1, %17 : vector<9x32xf32>
    %cst_11 = arith.constant 9.99999996E-13 : f32
    %19 = vector.broadcast %cst_11 : f32 to vector<9x1xf32>
    %20 = arith.addf %16, %19 : vector<9x1xf32>
    %21 = math.rsqrt %20 : vector<9x1xf32>
    %22 = vector.broadcast %21 : vector<9x1xf32> to vector<9x32xf32>
    %23 = arith.mulf %18, %22 : vector<9x32xf32>
    %24 = vector.broadcast %4 : vector<1x32xf32> to vector<9x32xf32>
    %25 = arith.mulf %23, %24 : vector<9x32xf32>
    %26 = vector.broadcast %5 : vector<1x32xf32> to vector<9x32xf32>
    %27 = arith.addf %25, %26 : vector<9x32xf32>
    %c0_12 = arith.constant 0 : index
    %c0_13 = arith.constant 0 : index
    %c0_14 = arith.constant 0 : index
    %28 = vector.load %arg4[%c0_12, %c0_13, %c0_14] : memref<2x32x96xf32, #tpu.memory_space<vmem>>, vector<1x32x96xf32>
    %29 = vector.shape_cast %28 : vector<1x32x96xf32> to vector<32x96xf32>
    %30 = arith.truncf %27 : vector<9x32xf32> to vector<9x32xbf16>
    %31 = arith.truncf %29 : vector<32x96xf32> to vector<32x96xbf16>
    %cst_15 = arith.constant dense<0.000000e+00> : vector<9x96xf32>
    %32 = tpu.matmul %30, %31, %cst_15 {dimension_numbers = #tpu.dot_dimension_numbers<[1], [0], [0], [1], [0, 0, 1, 1], [], []>} : vector<9x32xbf16>, vector<32x96xbf16>, vector<9x96xf32> -> vector<9x96xf32>
    %c0_16 = arith.constant 0 : index
    %c0_17 = arith.constant 0 : index
    %c0_18 = arith.constant 0 : index
    %33 = vector.load %arg5[%c0_16, %c0_17, %c0_18] : memref<2x1x96xf32, #tpu.memory_space<vmem>>, vector<1x1x96xf32>
    %34 = vector.shape_cast %33 : vector<1x1x96xf32> to vector<1x96xf32>
    %35 = vector.broadcast %34 : vector<1x96xf32> to vector<9x96xf32>
    %36 = arith.addf %32, %35 : vector<9x96xf32>
    %c0_19 = arith.constant 0 : index
    %c0_20 = arith.constant 0 : index
    %c0_21 = arith.constant 0 : index
    %37 = vector.load %arg10[%c0_19, %c0_20, %c0_21] : memref<2x6x32xf32, #tpu.memory_space<vmem>>, vector<1x6x32xf32>
    %38 = vector.shape_cast %37 : vector<1x6x32xf32> to vector<6x32xf32>
    %39 = vector.extract_strided_slice %36 {offsets = [0, 0], sizes = [9, 16], strides = [1, 1]} : vector<9x96xf32> to vector<9x16xf32>
    %40 = vector.extract_strided_slice %36 {offsets = [0, 32], sizes = [9, 16], strides = [1, 1]} : vector<9x96xf32> to vector<9x16xf32>
    %41 = vector.extract_strided_slice %36 {offsets = [0, 64], sizes = [9, 16], strides = [1, 1]} : vector<9x96xf32> to vector<9x16xf32>
    %42 = arith.truncf %39 : vector<9x16xf32> to vector<9x16xbf16>
    %43 = arith.truncf %40 : vector<9x16xf32> to vector<9x16xbf16>
    "tpu.trace_start"() <{level = 10 : i32, message = "sd,td->st"}> : () -> ()
    %cst_22 = arith.constant dense<0.000000e+00> : vector<9x9xf32>
    %44 = tpu.matmul %42, %43, %cst_22 {dimension_numbers = #tpu.dot_dimension_numbers<[1], [1], [0], [0], [0, 0, 1, 0], [], []>} : vector<9x16xbf16>, vector<9x16xbf16>, vector<9x9xf32> -> vector<9x9xf32>
    "tpu.trace_stop"() : () -> ()
    %cst_23 = arith.constant 2.500000e-01 : f32
    %45 = vector.broadcast %cst_23 : f32 to vector<9x9xf32>
    %46 = arith.mulf %44, %45 : vector<9x9xf32>
    %47 = vector.broadcast %3 : vector<1x9xf32> to vector<9x9xf32>
    %48 = arith.addf %46, %47 : vector<9x9xf32>
    %cst_24 = arith.constant dense<0xFF800000> : vector<9xf32>
    %49 = vector.multi_reduction <maximumf>, %48, %cst_24 [1] : vector<9x9xf32> to vector<9xf32>
    %50 = vector.shape_cast %49 : vector<9xf32> to vector<9x1xf32>
    %51 = vector.broadcast %50 : vector<9x1xf32> to vector<9x9xf32>
    %52 = arith.subf %48, %51 : vector<9x9xf32>
    %53 = math.exp %52 : vector<9x9xf32>
    %cst_25 = arith.constant dense<0.000000e+00> : vector<9xf32>
    %54 = vector.multi_reduction <add>, %53, %cst_25 [1] : vector<9x9xf32> to vector<9xf32>
    %55 = vector.shape_cast %54 : vector<9xf32> to vector<9x1xf32>
    %56 = tpu.reciprocal %55 {approx = true} : vector<9x1xf32> -> vector<9x1xf32>
    %57 = vector.broadcast %56 : vector<9x1xf32> to vector<9x9xf32>
    %58 = arith.mulf %53, %57 : vector<9x9xf32>
    %59 = arith.truncf %58 : vector<9x9xf32> to vector<9x9xbf16>
    %60 = arith.truncf %41 : vector<9x16xf32> to vector<9x16xbf16>
    %cst_26 = arith.constant dense<0.000000e+00> : vector<9x16xf32>
    %61 = tpu.matmul %59, %60, %cst_26 {dimension_numbers = #tpu.dot_dimension_numbers<[1], [0], [0], [1], [0, 0, 1, 1], [], []>} : vector<9x9xbf16>, vector<9x16xbf16>, vector<9x16xf32> -> vector<9x16xf32>
    %62 = vector.extract_strided_slice %36 {offsets = [0, 16], sizes = [9, 16], strides = [1, 1]} : vector<9x96xf32> to vector<9x16xf32>
    %63 = vector.extract_strided_slice %36 {offsets = [0, 48], sizes = [9, 16], strides = [1, 1]} : vector<9x96xf32> to vector<9x16xf32>
    %64 = vector.extract_strided_slice %36 {offsets = [0, 80], sizes = [9, 16], strides = [1, 1]} : vector<9x96xf32> to vector<9x16xf32>
    %65 = arith.truncf %62 : vector<9x16xf32> to vector<9x16xbf16>
    %66 = arith.truncf %63 : vector<9x16xf32> to vector<9x16xbf16>
    "tpu.trace_start"() <{level = 10 : i32, message = "sd,td->st"}> : () -> ()
    %cst_27 = arith.constant dense<0.000000e+00> : vector<9x9xf32>
    %67 = tpu.matmul %65, %66, %cst_27 {dimension_numbers = #tpu.dot_dimension_numbers<[1], [1], [0], [0], [0, 0, 1, 0], [], []>} : vector<9x16xbf16>, vector<9x16xbf16>, vector<9x9xf32> -> vector<9x9xf32>
    "tpu.trace_stop"() : () -> ()
    %cst_28 = arith.constant 2.500000e-01 : f32
    %68 = vector.broadcast %cst_28 : f32 to vector<9x9xf32>
    %69 = arith.mulf %67, %68 : vector<9x9xf32>
    %70 = vector.broadcast %3 : vector<1x9xf32> to vector<9x9xf32>
    %71 = arith.addf %69, %70 : vector<9x9xf32>
    %cst_29 = arith.constant dense<0xFF800000> : vector<9xf32>
    %72 = vector.multi_reduction <maximumf>, %71, %cst_29 [1] : vector<9x9xf32> to vector<9xf32>
    %73 = vector.shape_cast %72 : vector<9xf32> to vector<9x1xf32>
    %74 = vector.broadcast %73 : vector<9x1xf32> to vector<9x9xf32>
    %75 = arith.subf %71, %74 : vector<9x9xf32>
    %76 = math.exp %75 : vector<9x9xf32>
    %cst_30 = arith.constant dense<0.000000e+00> : vector<9xf32>
    %77 = vector.multi_reduction <add>, %76, %cst_30 [1] : vector<9x9xf32> to vector<9xf32>
    %78 = vector.shape_cast %77 : vector<9xf32> to vector<9x1xf32>
    %79 = tpu.reciprocal %78 {approx = true} : vector<9x1xf32> -> vector<9x1xf32>
    %80 = vector.broadcast %79 : vector<9x1xf32> to vector<9x9xf32>
    %81 = arith.mulf %76, %80 : vector<9x9xf32>
    %82 = arith.truncf %81 : vector<9x9xf32> to vector<9x9xbf16>
    %83 = arith.truncf %64 : vector<9x16xf32> to vector<9x16xbf16>
    %cst_31 = arith.constant dense<0.000000e+00> : vector<9x16xf32>
    %84 = tpu.matmul %82, %83, %cst_31 {dimension_numbers = #tpu.dot_dimension_numbers<[1], [0], [0], [1], [0, 0, 1, 1], [], []>} : vector<9x9xbf16>, vector<9x16xbf16>, vector<9x16xf32> -> vector<9x16xf32>
    %85 = tpu.concatenate %61, %84 in 1 : vector<9x16xf32>, vector<9x16xf32> -> vector<9x32xf32>
    %c0_32 = arith.constant 0 : index
    %c0_33 = arith.constant 0 : index
    %c0_34 = arith.constant 0 : index
    %86 = vector.load %arg6[%c0_32, %c0_33, %c0_34] : memref<2x32x32xf32, #tpu.memory_space<vmem>>, vector<1x32x32xf32>
    %87 = vector.shape_cast %86 : vector<1x32x32xf32> to vector<32x32xf32>
    %88 = arith.truncf %85 : vector<9x32xf32> to vector<9x32xbf16>
    %89 = arith.truncf %87 : vector<32x32xf32> to vector<32x32xbf16>
    %cst_35 = arith.constant dense<0.000000e+00> : vector<9x32xf32>
    %90 = tpu.matmul %88, %89, %cst_35 {dimension_numbers = #tpu.dot_dimension_numbers<[1], [0], [0], [1], [0, 0, 1, 1], [], []>} : vector<9x32xbf16>, vector<32x32xbf16>, vector<9x32xf32> -> vector<9x32xf32>
    %91 = vector.extract_strided_slice %38 {offsets = [0, 0], sizes = [1, 32], strides = [1, 1]} : vector<6x32xf32> to vector<1x32xf32>
    %92 = vector.broadcast %91 : vector<1x32xf32> to vector<9x32xf32>
    %93 = arith.addf %90, %92 : vector<9x32xf32>
    %94 = arith.addf %93, %27 : vector<9x32xf32>
    %95 = vector.extract_strided_slice %38 {offsets = [1, 0], sizes = [1, 32], strides = [1, 1]} : vector<6x32xf32> to vector<1x32xf32>
    %96 = vector.extract_strided_slice %38 {offsets = [2, 0], sizes = [1, 32], strides = [1, 1]} : vector<6x32xf32> to vector<1x32xf32>
    %cst_36 = arith.constant dense<0.000000e+00> : vector<9xf32>
    %97 = vector.multi_reduction <add>, %94, %cst_36 [1] : vector<9x32xf32> to vector<9xf32>
    %98 = vector.shape_cast %97 : vector<9xf32> to vector<9x1xf32>
    %cst_37 = arith.constant 3.200000e+01 : f32
    %99 = vector.broadcast %cst_37 : f32 to vector<9x1xf32>
    %100 = arith.divf %98, %99 : vector<9x1xf32>
    %101 = vector.broadcast %100 : vector<9x1xf32> to vector<9x32xf32>
    %102 = arith.subf %94, %101 : vector<9x32xf32>
    %103 = arith.mulf %102, %102 : vector<9x32xf32>
    %cst_38 = arith.constant dense<0.000000e+00> : vector<9xf32>
    %104 = vector.multi_reduction <add>, %103, %cst_38 [1] : vector<9x32xf32> to vector<9xf32>
    %105 = vector.shape_cast %104 : vector<9xf32> to vector<9x1xf32>
    %cst_39 = arith.constant 3.200000e+01 : f32
    %106 = vector.broadcast %cst_39 : f32 to vector<9x1xf32>
    %107 = arith.divf %105, %106 : vector<9x1xf32>
    %108 = vector.broadcast %100 : vector<9x1xf32> to vector<9x32xf32>
    %109 = arith.subf %94, %108 : vector<9x32xf32>
    %cst_40 = arith.constant 9.99999996E-13 : f32
    %110 = vector.broadcast %cst_40 : f32 to vector<9x1xf32>
    %111 = arith.addf %107, %110 : vector<9x1xf32>
    %112 = math.rsqrt %111 : vector<9x1xf32>
    %113 = vector.broadcast %112 : vector<9x1xf32> to vector<9x32xf32>
    %114 = arith.mulf %109, %113 : vector<9x32xf32>
    %115 = vector.broadcast %95 : vector<1x32xf32> to vector<9x32xf32>
    %116 = arith.mulf %114, %115 : vector<9x32xf32>
    %117 = vector.broadcast %96 : vector<1x32xf32> to vector<9x32xf32>
    %118 = arith.addf %116, %117 : vector<9x32xf32>
    %c0_41 = arith.constant 0 : index
    %c0_42 = arith.constant 0 : index
    %c0_43 = arith.constant 0 : index
    %119 = vector.load %arg7[%c0_41, %c0_42, %c0_43] : memref<2x32x64xf32, #tpu.memory_space<vmem>>, vector<1x32x64xf32>
    %120 = vector.shape_cast %119 : vector<1x32x64xf32> to vector<32x64xf32>
    %121 = arith.truncf %118 : vector<9x32xf32> to vector<9x32xbf16>
    %122 = arith.truncf %120 : vector<32x64xf32> to vector<32x64xbf16>
    %cst_44 = arith.constant dense<0.000000e+00> : vector<9x64xf32>
    %123 = tpu.matmul %121, %122, %cst_44 {dimension_numbers = #tpu.dot_dimension_numbers<[1], [0], [0], [1], [0, 0, 1, 1], [], []>} : vector<9x32xbf16>, vector<32x64xbf16>, vector<9x64xf32> -> vector<9x64xf32>
    %c0_45 = arith.constant 0 : index
    %c0_46 = arith.constant 0 : index
    %c0_47 = arith.constant 0 : index
    %124 = vector.load %arg8[%c0_45, %c0_46, %c0_47] : memref<2x1x64xf32, #tpu.memory_space<vmem>>, vector<1x1x64xf32>
    %125 = vector.shape_cast %124 : vector<1x1x64xf32> to vector<1x64xf32>
    %126 = vector.broadcast %125 : vector<1x64xf32> to vector<9x64xf32>
    %127 = arith.addf %123, %126 : vector<9x64xf32>
    %cst_48 = arith.constant 5.000000e-01 : f32
    %128 = vector.broadcast %cst_48 : f32 to vector<9x64xf32>
    %129 = arith.mulf %128, %127 : vector<9x64xf32>
    %cst_49 = arith.constant 4.471500e-02 : f32
    %130 = vector.broadcast %cst_49 : f32 to vector<9x64xf32>
    %131 = arith.mulf %130, %127 : vector<9x64xf32>
    %132 = arith.mulf %131, %127 : vector<9x64xf32>
    %133 = arith.mulf %132, %127 : vector<9x64xf32>
    %134 = arith.addf %127, %133 : vector<9x64xf32>
    %cst_50 = arith.constant 0.797884583 : f32
    %135 = vector.broadcast %cst_50 : f32 to vector<9x64xf32>
    %136 = arith.mulf %135, %134 : vector<9x64xf32>
    %137 = math.tanh %136 : vector<9x64xf32>
    %cst_51 = arith.constant 1.000000e+00 : f32
    %138 = vector.broadcast %cst_51 : f32 to vector<9x64xf32>
    %139 = arith.addf %138, %137 : vector<9x64xf32>
    %140 = arith.mulf %129, %139 : vector<9x64xf32>
    %c0_52 = arith.constant 0 : index
    %c0_53 = arith.constant 0 : index
    %c0_54 = arith.constant 0 : index
    %141 = vector.load %arg9[%c0_52, %c0_53, %c0_54] : memref<2x64x32xf32, #tpu.memory_space<vmem>>, vector<1x64x32xf32>
    %142 = vector.shape_cast %141 : vector<1x64x32xf32> to vector<64x32xf32>
    %143 = arith.truncf %140 : vector<9x64xf32> to vector<9x64xbf16>
    %144 = arith.truncf %142 : vector<64x32xf32> to vector<64x32xbf16>
    %cst_55 = arith.constant dense<0.000000e+00> : vector<9x32xf32>
    %145 = tpu.matmul %143, %144, %cst_55 {dimension_numbers = #tpu.dot_dimension_numbers<[1], [0], [0], [1], [0, 0, 1, 1], [], []>} : vector<9x64xbf16>, vector<64x32xbf16>, vector<9x32xf32> -> vector<9x32xf32>
    %146 = vector.extract_strided_slice %38 {offsets = [3, 0], sizes = [1, 32], strides = [1, 1]} : vector<6x32xf32> to vector<1x32xf32>
    %147 = vector.broadcast %146 : vector<1x32xf32> to vector<9x32xf32>
    %148 = arith.addf %145, %147 : vector<9x32xf32>
    %149 = arith.addf %148, %118 : vector<9x32xf32>
    %150 = vector.extract_strided_slice %38 {offsets = [4, 0], sizes = [1, 32], strides = [1, 1]} : vector<6x32xf32> to vector<1x32xf32>
    %151 = vector.extract_strided_slice %38 {offsets = [5, 0], sizes = [1, 32], strides = [1, 1]} : vector<6x32xf32> to vector<1x32xf32>
    %cst_56 = arith.constant dense<0.000000e+00> : vector<9xf32>
    %152 = vector.multi_reduction <add>, %149, %cst_56 [1] : vector<9x32xf32> to vector<9xf32>
    %153 = vector.shape_cast %152 : vector<9xf32> to vector<9x1xf32>
    %cst_57 = arith.constant 3.200000e+01 : f32
    %154 = vector.broadcast %cst_57 : f32 to vector<9x1xf32>
    %155 = arith.divf %153, %154 : vector<9x1xf32>
    %156 = vector.broadcast %155 : vector<9x1xf32> to vector<9x32xf32>
    %157 = arith.subf %149, %156 : vector<9x32xf32>
    %158 = arith.mulf %157, %157 : vector<9x32xf32>
    %cst_58 = arith.constant dense<0.000000e+00> : vector<9xf32>
    %159 = vector.multi_reduction <add>, %158, %cst_58 [1] : vector<9x32xf32> to vector<9xf32>
    %160 = vector.shape_cast %159 : vector<9xf32> to vector<9x1xf32>
    %cst_59 = arith.constant 3.200000e+01 : f32
    %161 = vector.broadcast %cst_59 : f32 to vector<9x1xf32>
    %162 = arith.divf %160, %161 : vector<9x1xf32>
    %163 = vector.broadcast %155 : vector<9x1xf32> to vector<9x32xf32>
    %164 = arith.subf %149, %163 : vector<9x32xf32>
    %cst_60 = arith.constant 9.99999996E-13 : f32
    %165 = vector.broadcast %cst_60 : f32 to vector<9x1xf32>
    %166 = arith.addf %162, %165 : vector<9x1xf32>
    %167 = math.rsqrt %166 : vector<9x1xf32>
    %168 = vector.broadcast %167 : vector<9x1xf32> to vector<9x32xf32>
    %169 = arith.mulf %164, %168 : vector<9x32xf32>
    %170 = vector.broadcast %150 : vector<1x32xf32> to vector<9x32xf32>
    %171 = arith.mulf %169, %170 : vector<9x32xf32>
    %172 = vector.broadcast %151 : vector<1x32xf32> to vector<9x32xf32>
    %173 = arith.addf %171, %172 : vector<9x32xf32>
    %c1_61 = arith.constant 1 : index
    %c0_62 = arith.constant 0 : index
    %c0_63 = arith.constant 0 : index
    %174 = vector.load %arg4[%c1_61, %c0_62, %c0_63] : memref<2x32x96xf32, #tpu.memory_space<vmem>>, vector<1x32x96xf32>
    %175 = vector.shape_cast %174 : vector<1x32x96xf32> to vector<32x96xf32>
    %176 = arith.truncf %173 : vector<9x32xf32> to vector<9x32xbf16>
    %177 = arith.truncf %175 : vector<32x96xf32> to vector<32x96xbf16>
    %cst_64 = arith.constant dense<0.000000e+00> : vector<9x96xf32>
    %178 = tpu.matmul %176, %177, %cst_64 {dimension_numbers = #tpu.dot_dimension_numbers<[1], [0], [0], [1], [0, 0, 1, 1], [], []>} : vector<9x32xbf16>, vector<32x96xbf16>, vector<9x96xf32> -> vector<9x96xf32>
    %c1_65 = arith.constant 1 : index
    %c0_66 = arith.constant 0 : index
    %c0_67 = arith.constant 0 : index
    %179 = vector.load %arg5[%c1_65, %c0_66, %c0_67] : memref<2x1x96xf32, #tpu.memory_space<vmem>>, vector<1x1x96xf32>
    %180 = vector.shape_cast %179 : vector<1x1x96xf32> to vector<1x96xf32>
    %181 = vector.broadcast %180 : vector<1x96xf32> to vector<9x96xf32>
    %182 = arith.addf %178, %181 : vector<9x96xf32>
    %c1_68 = arith.constant 1 : index
    %c0_69 = arith.constant 0 : index
    %c0_70 = arith.constant 0 : index
    %183 = vector.load %arg10[%c1_68, %c0_69, %c0_70] : memref<2x6x32xf32, #tpu.memory_space<vmem>>, vector<1x6x32xf32>
    %184 = vector.shape_cast %183 : vector<1x6x32xf32> to vector<6x32xf32>
    %185 = vector.extract_strided_slice %182 {offsets = [0, 0], sizes = [9, 16], strides = [1, 1]} : vector<9x96xf32> to vector<9x16xf32>
    %186 = vector.extract_strided_slice %182 {offsets = [0, 32], sizes = [9, 16], strides = [1, 1]} : vector<9x96xf32> to vector<9x16xf32>
    %187 = vector.extract_strided_slice %182 {offsets = [0, 64], sizes = [9, 16], strides = [1, 1]} : vector<9x96xf32> to vector<9x16xf32>
    %188 = arith.truncf %185 : vector<9x16xf32> to vector<9x16xbf16>
    %189 = arith.truncf %186 : vector<9x16xf32> to vector<9x16xbf16>
    "tpu.trace_start"() <{level = 10 : i32, message = "sd,td->st"}> : () -> ()
    %cst_71 = arith.constant dense<0.000000e+00> : vector<9x9xf32>
    %190 = tpu.matmul %188, %189, %cst_71 {dimension_numbers = #tpu.dot_dimension_numbers<[1], [1], [0], [0], [0, 0, 1, 0], [], []>} : vector<9x16xbf16>, vector<9x16xbf16>, vector<9x9xf32> -> vector<9x9xf32>
    "tpu.trace_stop"() : () -> ()
    %cst_72 = arith.constant 2.500000e-01 : f32
    %191 = vector.broadcast %cst_72 : f32 to vector<9x9xf32>
    %192 = arith.mulf %190, %191 : vector<9x9xf32>
    %193 = vector.broadcast %3 : vector<1x9xf32> to vector<9x9xf32>
    %194 = arith.addf %192, %193 : vector<9x9xf32>
    %cst_73 = arith.constant dense<0xFF800000> : vector<9xf32>
    %195 = vector.multi_reduction <maximumf>, %194, %cst_73 [1] : vector<9x9xf32> to vector<9xf32>
    %196 = vector.shape_cast %195 : vector<9xf32> to vector<9x1xf32>
    %197 = vector.broadcast %196 : vector<9x1xf32> to vector<9x9xf32>
    %198 = arith.subf %194, %197 : vector<9x9xf32>
    %199 = math.exp %198 : vector<9x9xf32>
    %cst_74 = arith.constant dense<0.000000e+00> : vector<9xf32>
    %200 = vector.multi_reduction <add>, %199, %cst_74 [1] : vector<9x9xf32> to vector<9xf32>
    %201 = vector.shape_cast %200 : vector<9xf32> to vector<9x1xf32>
    %202 = tpu.reciprocal %201 {approx = true} : vector<9x1xf32> -> vector<9x1xf32>
    %203 = vector.broadcast %202 : vector<9x1xf32> to vector<9x9xf32>
    %204 = arith.mulf %199, %203 : vector<9x9xf32>
    %205 = arith.truncf %204 : vector<9x9xf32> to vector<9x9xbf16>
    %206 = arith.truncf %187 : vector<9x16xf32> to vector<9x16xbf16>
    %cst_75 = arith.constant dense<0.000000e+00> : vector<9x16xf32>
    %207 = tpu.matmul %205, %206, %cst_75 {dimension_numbers = #tpu.dot_dimension_numbers<[1], [0], [0], [1], [0, 0, 1, 1], [], []>} : vector<9x9xbf16>, vector<9x16xbf16>, vector<9x16xf32> -> vector<9x16xf32>
    %208 = vector.extract_strided_slice %182 {offsets = [0, 16], sizes = [9, 16], strides = [1, 1]} : vector<9x96xf32> to vector<9x16xf32>
    %209 = vector.extract_strided_slice %182 {offsets = [0, 48], sizes = [9, 16], strides = [1, 1]} : vector<9x96xf32> to vector<9x16xf32>
    %210 = vector.extract_strided_slice %182 {offsets = [0, 80], sizes = [9, 16], strides = [1, 1]} : vector<9x96xf32> to vector<9x16xf32>
    %211 = arith.truncf %208 : vector<9x16xf32> to vector<9x16xbf16>
    %212 = arith.truncf %209 : vector<9x16xf32> to vector<9x16xbf16>
    "tpu.trace_start"() <{level = 10 : i32, message = "sd,td->st"}> : () -> ()
    %cst_76 = arith.constant dense<0.000000e+00> : vector<9x9xf32>
    %213 = tpu.matmul %211, %212, %cst_76 {dimension_numbers = #tpu.dot_dimension_numbers<[1], [1], [0], [0], [0, 0, 1, 0], [], []>} : vector<9x16xbf16>, vector<9x16xbf16>, vector<9x9xf32> -> vector<9x9xf32>
    "tpu.trace_stop"() : () -> ()
    %cst_77 = arith.constant 2.500000e-01 : f32
    %214 = vector.broadcast %cst_77 : f32 to vector<9x9xf32>
    %215 = arith.mulf %213, %214 : vector<9x9xf32>
    %216 = vector.broadcast %3 : vector<1x9xf32> to vector<9x9xf32>
    %217 = arith.addf %215, %216 : vector<9x9xf32>
    %cst_78 = arith.constant dense<0xFF800000> : vector<9xf32>
    %218 = vector.multi_reduction <maximumf>, %217, %cst_78 [1] : vector<9x9xf32> to vector<9xf32>
    %219 = vector.shape_cast %218 : vector<9xf32> to vector<9x1xf32>
    %220 = vector.broadcast %219 : vector<9x1xf32> to vector<9x9xf32>
    %221 = arith.subf %217, %220 : vector<9x9xf32>
    %222 = math.exp %221 : vector<9x9xf32>
    %cst_79 = arith.constant dense<0.000000e+00> : vector<9xf32>
    %223 = vector.multi_reduction <add>, %222, %cst_79 [1] : vector<9x9xf32> to vector<9xf32>
    %224 = vector.shape_cast %223 : vector<9xf32> to vector<9x1xf32>
    %225 = tpu.reciprocal %224 {approx = true} : vector<9x1xf32> -> vector<9x1xf32>
    %226 = vector.broadcast %225 : vector<9x1xf32> to vector<9x9xf32>
    %227 = arith.mulf %222, %226 : vector<9x9xf32>
    %228 = arith.truncf %227 : vector<9x9xf32> to vector<9x9xbf16>
    %229 = arith.truncf %210 : vector<9x16xf32> to vector<9x16xbf16>
    %cst_80 = arith.constant dense<0.000000e+00> : vector<9x16xf32>
    %230 = tpu.matmul %228, %229, %cst_80 {dimension_numbers = #tpu.dot_dimension_numbers<[1], [0], [0], [1], [0, 0, 1, 1], [], []>} : vector<9x9xbf16>, vector<9x16xbf16>, vector<9x16xf32> -> vector<9x16xf32>
    %231 = tpu.concatenate %207, %230 in 1 : vector<9x16xf32>, vector<9x16xf32> -> vector<9x32xf32>
    %c1_81 = arith.constant 1 : index
    %c0_82 = arith.constant 0 : index
    %c0_83 = arith.constant 0 : index
    %232 = vector.load %arg6[%c1_81, %c0_82, %c0_83] : memref<2x32x32xf32, #tpu.memory_space<vmem>>, vector<1x32x32xf32>
    %233 = vector.shape_cast %232 : vector<1x32x32xf32> to vector<32x32xf32>
    %234 = arith.truncf %231 : vector<9x32xf32> to vector<9x32xbf16>
    %235 = arith.truncf %233 : vector<32x32xf32> to vector<32x32xbf16>
    %cst_84 = arith.constant dense<0.000000e+00> : vector<9x32xf32>
    %236 = tpu.matmul %234, %235, %cst_84 {dimension_numbers = #tpu.dot_dimension_numbers<[1], [0], [0], [1], [0, 0, 1, 1], [], []>} : vector<9x32xbf16>, vector<32x32xbf16>, vector<9x32xf32> -> vector<9x32xf32>
    %237 = vector.extract_strided_slice %184 {offsets = [0, 0], sizes = [1, 32], strides = [1, 1]} : vector<6x32xf32> to vector<1x32xf32>
    %238 = vector.broadcast %237 : vector<1x32xf32> to vector<9x32xf32>
    %239 = arith.addf %236, %238 : vector<9x32xf32>
    %240 = arith.addf %239, %173 : vector<9x32xf32>
    %241 = vector.extract_strided_slice %184 {offsets = [1, 0], sizes = [1, 32], strides = [1, 1]} : vector<6x32xf32> to vector<1x32xf32>
    %242 = vector.extract_strided_slice %184 {offsets = [2, 0], sizes = [1, 32], strides = [1, 1]} : vector<6x32xf32> to vector<1x32xf32>
    %cst_85 = arith.constant dense<0.000000e+00> : vector<9xf32>
    %243 = vector.multi_reduction <add>, %240, %cst_85 [1] : vector<9x32xf32> to vector<9xf32>
    %244 = vector.shape_cast %243 : vector<9xf32> to vector<9x1xf32>
    %cst_86 = arith.constant 3.200000e+01 : f32
    %245 = vector.broadcast %cst_86 : f32 to vector<9x1xf32>
    %246 = arith.divf %244, %245 : vector<9x1xf32>
    %247 = vector.broadcast %246 : vector<9x1xf32> to vector<9x32xf32>
    %248 = arith.subf %240, %247 : vector<9x32xf32>
    %249 = arith.mulf %248, %248 : vector<9x32xf32>
    %cst_87 = arith.constant dense<0.000000e+00> : vector<9xf32>
    %250 = vector.multi_reduction <add>, %249, %cst_87 [1] : vector<9x32xf32> to vector<9xf32>
    %251 = vector.shape_cast %250 : vector<9xf32> to vector<9x1xf32>
    %cst_88 = arith.constant 3.200000e+01 : f32
    %252 = vector.broadcast %cst_88 : f32 to vector<9x1xf32>
    %253 = arith.divf %251, %252 : vector<9x1xf32>
    %254 = vector.broadcast %246 : vector<9x1xf32> to vector<9x32xf32>
    %255 = arith.subf %240, %254 : vector<9x32xf32>
    %cst_89 = arith.constant 9.99999996E-13 : f32
    %256 = vector.broadcast %cst_89 : f32 to vector<9x1xf32>
    %257 = arith.addf %253, %256 : vector<9x1xf32>
    %258 = math.rsqrt %257 : vector<9x1xf32>
    %259 = vector.broadcast %258 : vector<9x1xf32> to vector<9x32xf32>
    %260 = arith.mulf %255, %259 : vector<9x32xf32>
    %261 = vector.broadcast %241 : vector<1x32xf32> to vector<9x32xf32>
    %262 = arith.mulf %260, %261 : vector<9x32xf32>
    %263 = vector.broadcast %242 : vector<1x32xf32> to vector<9x32xf32>
    %264 = arith.addf %262, %263 : vector<9x32xf32>
    %c1_90 = arith.constant 1 : index
    %c0_91 = arith.constant 0 : index
    %c0_92 = arith.constant 0 : index
    %265 = vector.load %arg7[%c1_90, %c0_91, %c0_92] : memref<2x32x64xf32, #tpu.memory_space<vmem>>, vector<1x32x64xf32>
    %266 = vector.shape_cast %265 : vector<1x32x64xf32> to vector<32x64xf32>
    %267 = arith.truncf %264 : vector<9x32xf32> to vector<9x32xbf16>
    %268 = arith.truncf %266 : vector<32x64xf32> to vector<32x64xbf16>
    %cst_93 = arith.constant dense<0.000000e+00> : vector<9x64xf32>
    %269 = tpu.matmul %267, %268, %cst_93 {dimension_numbers = #tpu.dot_dimension_numbers<[1], [0], [0], [1], [0, 0, 1, 1], [], []>} : vector<9x32xbf16>, vector<32x64xbf16>, vector<9x64xf32> -> vector<9x64xf32>
    %c1_94 = arith.constant 1 : index
    %c0_95 = arith.constant 0 : index
    %c0_96 = arith.constant 0 : index
    %270 = vector.load %arg8[%c1_94, %c0_95, %c0_96] : memref<2x1x64xf32, #tpu.memory_space<vmem>>, vector<1x1x64xf32>
    %271 = vector.shape_cast %270 : vector<1x1x64xf32> to vector<1x64xf32>
    %272 = vector.broadcast %271 : vector<1x64xf32> to vector<9x64xf32>
    %273 = arith.addf %269, %272 : vector<9x64xf32>
    %cst_97 = arith.constant 5.000000e-01 : f32
    %274 = vector.broadcast %cst_97 : f32 to vector<9x64xf32>
    %275 = arith.mulf %274, %273 : vector<9x64xf32>
    %cst_98 = arith.constant 4.471500e-02 : f32
    %276 = vector.broadcast %cst_98 : f32 to vector<9x64xf32>
    %277 = arith.mulf %276, %273 : vector<9x64xf32>
    %278 = arith.mulf %277, %273 : vector<9x64xf32>
    %279 = arith.mulf %278, %273 : vector<9x64xf32>
    %280 = arith.addf %273, %279 : vector<9x64xf32>
    %cst_99 = arith.constant 0.797884583 : f32
    %281 = vector.broadcast %cst_99 : f32 to vector<9x64xf32>
    %282 = arith.mulf %281, %280 : vector<9x64xf32>
    %283 = math.tanh %282 : vector<9x64xf32>
    %cst_100 = arith.constant 1.000000e+00 : f32
    %284 = vector.broadcast %cst_100 : f32 to vector<9x64xf32>
    %285 = arith.addf %284, %283 : vector<9x64xf32>
    %286 = arith.mulf %275, %285 : vector<9x64xf32>
    %c1_101 = arith.constant 1 : index
    %c0_102 = arith.constant 0 : index
    %c0_103 = arith.constant 0 : index
    %287 = vector.load %arg9[%c1_101, %c0_102, %c0_103] : memref<2x64x32xf32, #tpu.memory_space<vmem>>, vector<1x64x32xf32>
    %288 = vector.shape_cast %287 : vector<1x64x32xf32> to vector<64x32xf32>
    %289 = arith.truncf %286 : vector<9x64xf32> to vector<9x64xbf16>
    %290 = arith.truncf %288 : vector<64x32xf32> to vector<64x32xbf16>
    %cst_104 = arith.constant dense<0.000000e+00> : vector<9x32xf32>
    %291 = tpu.matmul %289, %290, %cst_104 {dimension_numbers = #tpu.dot_dimension_numbers<[1], [0], [0], [1], [0, 0, 1, 1], [], []>} : vector<9x64xbf16>, vector<64x32xbf16>, vector<9x32xf32> -> vector<9x32xf32>
    %292 = vector.extract_strided_slice %184 {offsets = [3, 0], sizes = [1, 32], strides = [1, 1]} : vector<6x32xf32> to vector<1x32xf32>
    %293 = vector.broadcast %292 : vector<1x32xf32> to vector<9x32xf32>
    %294 = arith.addf %291, %293 : vector<9x32xf32>
    %295 = arith.addf %294, %264 : vector<9x32xf32>
    %296 = vector.extract_strided_slice %184 {offsets = [4, 0], sizes = [1, 32], strides = [1, 1]} : vector<6x32xf32> to vector<1x32xf32>
    %297 = vector.extract_strided_slice %184 {offsets = [5, 0], sizes = [1, 32], strides = [1, 1]} : vector<6x32xf32> to vector<1x32xf32>
    %cst_105 = arith.constant dense<0.000000e+00> : vector<9xf32>
    %298 = vector.multi_reduction <add>, %295, %cst_105 [1] : vector<9x32xf32> to vector<9xf32>
    %299 = vector.shape_cast %298 : vector<9xf32> to vector<9x1xf32>
    %cst_106 = arith.constant 3.200000e+01 : f32
    %300 = vector.broadcast %cst_106 : f32 to vector<9x1xf32>
    %301 = arith.divf %299, %300 : vector<9x1xf32>
    %302 = vector.broadcast %301 : vector<9x1xf32> to vector<9x32xf32>
    %303 = arith.subf %295, %302 : vector<9x32xf32>
    %304 = arith.mulf %303, %303 : vector<9x32xf32>
    %cst_107 = arith.constant dense<0.000000e+00> : vector<9xf32>
    %305 = vector.multi_reduction <add>, %304, %cst_107 [1] : vector<9x32xf32> to vector<9xf32>
    %306 = vector.shape_cast %305 : vector<9xf32> to vector<9x1xf32>
    %cst_108 = arith.constant 3.200000e+01 : f32
    %307 = vector.broadcast %cst_108 : f32 to vector<9x1xf32>
    %308 = arith.divf %306, %307 : vector<9x1xf32>
    %309 = vector.broadcast %301 : vector<9x1xf32> to vector<9x32xf32>
    %310 = arith.subf %295, %309 : vector<9x32xf32>
    %cst_109 = arith.constant 9.99999996E-13 : f32
    %311 = vector.broadcast %cst_109 : f32 to vector<9x1xf32>
    %312 = arith.addf %308, %311 : vector<9x1xf32>
    %313 = math.rsqrt %312 : vector<9x1xf32>
    %314 = vector.broadcast %313 : vector<9x1xf32> to vector<9x32xf32>
    %315 = arith.mulf %310, %314 : vector<9x32xf32>
    %316 = vector.broadcast %296 : vector<1x32xf32> to vector<9x32xf32>
    %317 = arith.mulf %315, %316 : vector<9x32xf32>
    %318 = vector.broadcast %297 : vector<1x32xf32> to vector<9x32xf32>
    %319 = arith.addf %317, %318 : vector<9x32xf32>
    %c0_110 = arith.constant 0 : index
    %c0_111 = arith.constant 0 : index
    %320 = vector.load %arg12[%c0_110, %c0_111] : memref<1x2xf32, #tpu.memory_space<vmem>>, vector<1x2xf32>
    %321 = vector.extract_strided_slice %319 {offsets = [0, 0], sizes = [1, 32], strides = [1, 1]} : vector<9x32xf32> to vector<1x32xf32>
    %c0_112 = arith.constant 0 : index
    %c0_113 = arith.constant 0 : index
    %c0_114 = arith.constant 0 : index
    %322 = vector.load %arg11[%c0_112, %c0_113, %c0_114] : memref<2x32x2xf32, #tpu.memory_space<vmem>>, vector<1x32x2xf32>
    %323 = vector.shape_cast %322 : vector<1x32x2xf32> to vector<32x2xf32>
    %324 = arith.truncf %321 : vector<1x32xf32> to vector<1x32xbf16>
    %325 = arith.truncf %323 : vector<32x2xf32> to vector<32x2xbf16>
    %cst_115 = arith.constant dense<0.000000e+00> : vector<1x2xf32>
    %326 = tpu.matmul %324, %325, %cst_115 {dimension_numbers = #tpu.dot_dimension_numbers<[1], [0], [0], [1], [0, 0, 1, 1], [], []>} : vector<1x32xbf16>, vector<32x2xbf16>, vector<1x2xf32> -> vector<1x2xf32>
    %327 = arith.addf %320, %326 : vector<1x2xf32>
    %328 = vector.extract_strided_slice %319 {offsets = [1, 0], sizes = [1, 32], strides = [1, 1]} : vector<9x32xf32> to vector<1x32xf32>
    %c1_116 = arith.constant 1 : index
    %c0_117 = arith.constant 0 : index
    %c0_118 = arith.constant 0 : index
    %329 = vector.load %arg11[%c1_116, %c0_117, %c0_118] : memref<2x32x2xf32, #tpu.memory_space<vmem>>, vector<1x32x2xf32>
    %330 = vector.shape_cast %329 : vector<1x32x2xf32> to vector<32x2xf32>
    %331 = arith.truncf %328 : vector<1x32xf32> to vector<1x32xbf16>
    %332 = arith.truncf %330 : vector<32x2xf32> to vector<32x2xbf16>
    %cst_119 = arith.constant dense<0.000000e+00> : vector<1x2xf32>
    %333 = tpu.matmul %331, %332, %cst_119 {dimension_numbers = #tpu.dot_dimension_numbers<[1], [0], [0], [1], [0, 0, 1, 1], [], []>} : vector<1x32xbf16>, vector<32x2xbf16>, vector<1x2xf32> -> vector<1x2xf32>
    %334 = arith.addf %327, %333 : vector<1x2xf32>
    %cst_120 = arith.constant dense<0xFF800000> : vector<1xf32>
    %335 = vector.multi_reduction <maximumf>, %334, %cst_120 [1] : vector<1x2xf32> to vector<1xf32>
    %336 = vector.shape_cast %335 : vector<1xf32> to vector<1x1xf32>
    %337 = vector.broadcast %336 : vector<1x1xf32> to vector<1x2xf32>
    %338 = arith.subf %334, %337 : vector<1x2xf32>
    %339 = math.exp %338 : vector<1x2xf32>
    %cst_121 = arith.constant dense<0.000000e+00> : vector<1xf32>
    %340 = vector.multi_reduction <add>, %339, %cst_121 [1] : vector<1x2xf32> to vector<1xf32>
    %341 = vector.shape_cast %340 : vector<1xf32> to vector<1x1xf32>
    %342 = math.log %341 : vector<1x1xf32>
    %343 = arith.addf %342, %336 : vector<1x1xf32>
    %344 = vector.broadcast %343 : vector<1x1xf32> to vector<1x2xf32>
    %345 = arith.subf %334, %344 : vector<1x2xf32>
    %c0_122 = arith.constant 0 : index
    %c0_123 = arith.constant 0 : index
    %c0_124 = arith.constant 0 : index
    %346 = vector.load %arg13[%c0_122, %c0_123, %c0_124] : memref<1x1x2xf32, #tpu.memory_space<vmem>>, vector<1x1x2xf32>
    %347 = vector.shape_cast %346 : vector<1x1x2xf32> to vector<1x2xf32>
    %348 = vector.shape_cast %345 : vector<1x2xf32> to vector<1x1x2xf32>
    tpu.vector_store %arg13[%c0_122, %c0_123, %c0_124], %348 {strides = array<i32>} : memref<1x1x2xf32, #tpu.memory_space<vmem>>, vector<1x1x2xf32>,
    return
  }
  func.func @transform_0(%arg0: i32) -> (i32, i32, i32) {
    %c0_i32 = arith.constant 0 : i32
    %c0_i32_0 = arith.constant 0 : i32
    %c0_i32_1 = arith.constant 0 : i32
    return %arg0, %c0_i32, %c0_i32_0 : i32, i32, i32
  }
  func.func @transform_1(%arg0: i32) -> (i32, i32, i32) {
    %c0_i32 = arith.constant 0 : i32
    %c0_i32_0 = arith.constant 0 : i32
    %c0_i32_1 = arith.constant 0 : i32
    return %arg0, %c0_i32, %c0_i32_0 : i32, i32, i32
  }
  func.func @transform_2(%arg0: i32) -> (i32, i32) {
    %c0_i32 = arith.constant 0 : i32
    %c0_i32_0 = arith.constant 0 : i32
    %c0_i32_1 = arith.constant 0 : i32
    return %c0_i32, %c0_i32_0 : i32, i32
  }
  func.func @transform_3(%arg0: i32) -> (i32, i32, i32) {
    %c0_i32 = arith.constant 0 : i32
    %c0_i32_0 = arith.constant 0 : i32
    %c0_i32_1 = arith.constant 0 : i32
    %c0_i32_2 = arith.constant 0 : i32
    return %c0_i32, %c0_i32_0, %c0_i32_1 : i32, i32, i32
  }
  func.func @transform_4(%arg0: i32) -> (i32, i32, i32) {
    %c0_i32 = arith.constant 0 : i32
    %c0_i32_0 = arith.constant 0 : i32
    %c0_i32_1 = arith.constant 0 : i32
    %c0_i32_2 = arith.constant 0 : i32
    return %c0_i32, %c0_i32_0, %c0_i32_1 : i32, i32, i32
  }
  func.func @transform_5(%arg0: i32) -> (i32, i32, i32) {
    %c0_i32 = arith.constant 0 : i32
    %c0_i32_0 = arith.constant 0 : i32
    %c0_i32_1 = arith.constant 0 : i32
    %c0_i32_2 = arith.constant 0 : i32
    return %c0_i32, %c0_i32_0, %c0_i32_1 : i32, i32, i32
  }
  func.func @transform_6(%arg0: i32) -> (i32, i32, i32) {
    %c0_i32 = arith.constant 0 : i32
    %c0_i32_0 = arith.constant 0 : i32
    %c0_i32_1 = arith.constant 0 : i32
    %c0_i32_2 = arith.constant 0 : i32
    return %c0_i32, %c0_i32_0, %c0_i32_1 : i32, i32, i32
  }
  func.func @transform_7(%arg0: i32) -> (i32, i32, i32) {
    %c0_i32 = arith.constant 0 : i32
    %c0_i32_0 = arith.constant 0 : i32
    %c0_i32_1 = arith.constant 0 : i32
    %c0_i32_2 = arith.constant 0 : i32
    return %c0_i32, %c0_i32_0, %c0_i32_1 : i32, i32, i32
  }
  func.func @transform_8(%arg0: i32) -> (i32, i32, i32) {
    %c0_i32 = arith.constant 0 : i32
    %c0_i32_0 = arith.constant 0 : i32
    %c0_i32_1 = arith.constant 0 : i32
    %c0_i32_2 = arith.constant 0 : i32
    return %c0_i32, %c0_i32_0, %c0_i32_1 : i32, i32, i32
  }
  func.func @transform_9(%arg0: i32) -> (i32, i32, i32) {
    %c0_i32 = arith.constant 0 : i32
    %c0_i32_0 = arith.constant 0 : i32
    %c0_i32_1 = arith.constant 0 : i32
    %c0_i32_2 = arith.constant 0 : i32
    return %c0_i32, %c0_i32_0, %c0_i32_1 : i32, i32, i32
  }
  func.func @transform_10(%arg0: i32) -> (i32, i32, i32) {
    %c0_i32 = arith.constant 0 : i32
    %c0_i32_0 = arith.constant 0 : i32
    %c0_i32_1 = arith.constant 0 : i32
    %c0_i32_2 = arith.constant 0 : i32
    return %c0_i32, %c0_i32_0, %c0_i32_1 : i32, i32, i32
  }
  func.func @transform_11(%arg0: i32) -> (i32, i32) {
    %c0_i32 = arith.constant 0 : i32
    %c0_i32_0 = arith.constant 0 : i32
    %c0_i32_1 = arith.constant 0 : i32
    return %c0_i32, %c0_i32_0 : i32, i32
  }
  func.func @transform_12(%arg0: i32) -> (i32, i32, i32) {
    %c0_i32 = arith.constant 0 : i32
    %c0_i32_0 = arith.constant 0 : i32
    %c0_i32_1 = arith.constant 0 : i32
    return %arg0, %c0_i32, %c0_i32_0 : i32, i32, i32
  }
}

</mosaic_0001>

<llo_original>
// kernel: prefix_bert_forward.1
$region0: #{prefix_bert_forward.1}
  #allocation0 [shape = 'u32[]', space=smem, size = 0x4, offset = 0x4, fixed_abs, tag = 'smem constant byte address 0x4 - core index']
  #allocation1 [shape = 'u32[72,128]{1,0:T(1,128)}', space=vmem, size = 0x9000, scoped, tag = 'internal scratch']
  %s0 = inlined_call_operand.vmem [shape: f32[2,9,32], index: 0, kind: input, shape index: {}]
  %s1 = inlined_call_operand.vmem [shape: f32[2,1,9], index: 1, kind: input, shape index: {}]
  %s2 = inlined_call_operand.vmem [shape: f32[2,32], index: 2, kind: input, shape index: {}]
  %s3 = inlined_call_operand.vmem [shape: f32[2,32,96], index: 3, kind: input, shape index: {}]
  %s4 = inlined_call_operand.vmem [shape: f32[2,1,96], index: 4, kind: input, shape index: {}]
  %s5 = inlined_call_operand.vmem [shape: f32[2,32,32], index: 5, kind: input, shape index: {}]
  %s6 = inlined_call_operand.vmem [shape: f32[2,32,64], index: 6, kind: input, shape index: {}]
  %s7 = inlined_call_operand.vmem [shape: f32[2,1,64], index: 7, kind: input, shape index: {}]
  %s8 = inlined_call_operand.vmem [shape: f32[2,64,32], index: 8, kind: input, shape index: {}]
  %s9 = inlined_call_operand.vmem [shape: f32[2,6,32], index: 9, kind: input, shape index: {}]
  %s10 = inlined_call_operand.vmem [shape: f32[2,32,2], index: 10, kind: input, shape index: {}]
  %s11 = inlined_call_operand.vmem [shape: f32[1,2], index: 11, kind: input, shape index: {}]
  %s12 = inlined_call_operand.hbm [shape: f32[2,1,2], index: 12, kind: output, shape index: {}]
  %s13 = sld [smem:[#allocation0]]
  $region81: #{prefix_bert_forward.1} parent=0
    _
  %s15 = ssub.s32 1, %s13
  %s16 = scalar_select 0, %s15, %s13
  $region1: #{prefix_bert_forward.1} parent=0
    #allocation2 [shape = 'u8[1024]{0}', space=vmem, size = 0x400, scoped, tag = 'output window, operand 0']
    #allocation3 [shape = 's32[2]{0}', space=sflag, size = 0x8, scoped, tag = 'scoped memory for prefix_bert_forward.1']
    %17 = vsyncpa [#allocation3], 0
    %s18 = scalar_lea.sflag [#allocation3], 1
    %19 = vsyncpa %s18, 0
    loop: start=0, step=1, limit=4
    $region2: #{prefix_bert_forward.1} parent=1 // loop_pre_header
      _
    $region3: #{prefix_bert_forward.1} parent=1 // loop_header
      %s21 = sphi 0, %s25
      %p22 = scmp.ge.s32.totalorder %s21, 4
      %s31 = sphi 0, %s33
      %s34 = sphi 0, %s31
      %s35 = sphi 0, %s34
      %s51 = sphi 0, %s35
      %s57 = sphi 0, %s59
      %s60 = sphi 0, %s57
      %s61 = sphi 0, %s60
      %s77 = sphi 0, %s61
      %s81 = sphi 0, %s81
      %s83 = sphi 0, %s81
      %s84 = sphi 0, %s83
      %s98 = sphi 0, %s84
      %s102 = sphi 0, %s102
      %s104 = sphi 0, %s102
      %s105 = sphi 0, %s104
      %s119 = sphi 0, %s105
      %s123 = sphi 0, %s123
      %s125 = sphi 0, %s123
      %s126 = sphi 0, %s125
      %s140 = sphi 0, %s126
      %s144 = sphi 0, %s144
      %s146 = sphi 0, %s144
      %s147 = sphi 0, %s146
      %s161 = sphi 0, %s147
      %s165 = sphi 0, %s165
      %s167 = sphi 0, %s165
      %s168 = sphi 0, %s167
      %s182 = sphi 0, %s168
      %s186 = sphi 0, %s186
      %s188 = sphi 0, %s186
      %s189 = sphi 0, %s188
      %s203 = sphi 0, %s189
      %s207 = sphi 0, %s207
      %s209 = sphi 0, %s207
      %s210 = sphi 0, %s209
      %s224 = sphi 0, %s210
      %s228 = sphi 0, %s228
      %s230 = sphi 0, %s228
      %s231 = sphi 0, %s230
      %s245 = sphi 0, %s231
      %s249 = sphi 0, %s249
      %s251 = sphi 0, %s249
      %s252 = sphi 0, %s251
      %s266 = sphi 0, %s252
      %s270 = sphi 0, %s270
      %s272 = sphi 0, %s270
      %s273 = sphi 0, %s272
      %s287 = sphi 0, %s273
      %s293 = sphi 0, %s295
      %s296 = sphi 0, %s293
      %s297 = sphi 0, %s296
      %s313 = sphi 0, %s297
    $region4: #{prefix_bert_forward.1} parent=1 // loop_header_branch
      %24 = sbr.rel (%p22) target = $region8
    $region5: #{prefix_bert_forward.1} parent=1 // loop_body
      %s26 = ssub.s32 %s21, 1
      %s27 = ssub.s32 %s21, 2
      %s28 = sadd.s32 %s21, 1
      %s29 = ssub.s32 %s21, %s28
      %p30 = scmp.eq.s32.totalorder %s29, 0
      %s32 = sadd.s32 %s31, 1
      %s33 = scalar_select %p30, %s31, %s32
      %p36 = pneg %p30
      %p37 = scmp.eq.s32.totalorder %s21, 1
      %p38 = por %p36, %p37
      %p39 = scmp.ne.s32.totalorder %s31, %s34
      %p40 = scmp.eq.s32.totalorder %s21, 0
      %p41 = por %p39, %p40
      %p42 = scmp.ne.s32.totalorder %s31, %s34
      %p43 = scmp.eq.s32.totalorder %s26, 1
      %p44 = por %p42, %p43
      %p45 = scmp.ne.s32.totalorder %s34, %s35
      %p46 = scmp.eq.s32.totalorder %s26, 0
      %p47 = por %p45, %p46
      %p48 = scmp.ne.s32.totalorder %s34, %s35
      %p49 = scmp.eq.s32.totalorder %s27, 1
      %p50 = por %p48, %p49
      %p52 = scmp.ne.s32.totalorder %s35, %s51
      %p53 = scmp.eq.s32.totalorder %s27, 0
      %p54 = por %p52, %p53
      %s55 = ssub.s32 %s21, %s28
      %p56 = scmp.eq.s32.totalorder %s55, 0
      %s58 = sadd.s32 %s57, 1
      %s59 = scalar_select %p56, %s57, %s58
      %p62 = pneg %p56
      %p63 = scmp.eq.s32.totalorder %s21, 1
      %p64 = por %p62, %p63
      %p65 = scmp.ne.s32.totalorder %s57, %s60
      %p66 = scmp.eq.s32.totalorder %s21, 0
      %p67 = por %p65, %p66
      %p68 = scmp.ne.s32.totalorder %s57, %s60
      %p69 = scmp.eq.s32.totalorder %s26, 1
      %p70 = por %p68, %p69
      %p71 = scmp.ne.s32.totalorder %s60, %s61
      %p72 = scmp.eq.s32.totalorder %s26, 0
      %p73 = por %p71, %p72
      %p74 = scmp.ne.s32.totalorder %s60, %s61
      %p75 = scmp.eq.s32.totalorder %s27, 1
      %p76 = por %p74, %p75
      %p78 = scmp.ne.s32.totalorder %s61, %s77
      %p79 = scmp.eq.s32.totalorder %s27, 0
      %p80 = por %p78, %p79
      %s82 = sadd.s32 %s81, 1
      %p85 = scmp.eq.s32.totalorder %s21, 1
      %p86 = scmp.ne.s32.totalorder %s81, %s83
      %p87 = scmp.eq.s32.totalorder %s21, 0
      %p88 = por %p86, %p87
      %p89 = scmp.ne.s32.totalorder %s81, %s83
      %p90 = scmp.eq.s32.totalorder %s26, 1
      %p91 = por %p89, %p90
      %p92 = scmp.ne.s32.totalorder %s83, %s84
      %p93 = scmp.eq.s32.totalorder %s26, 0
      %p94 = por %p92, %p93
      %p95 = scmp.ne.s32.totalorder %s83, %s84
      %p96 = scmp.eq.s32.totalorder %s27, 1
      %p97 = por %p95, %p96
      %p99 = scmp.ne.s32.totalorder %s84, %s98
      %p100 = scmp.eq.s32.totalorder %s27, 0
      %p101 = por %p99, %p100
      %s103 = sadd.s32 %s102, 1
      %p106 = scmp.eq.s32.totalorder %s21, 1
      %p107 = scmp.ne.s32.totalorder %s102, %s104
      %p108 = scmp.eq.s32.totalorder %s21, 0
      %p109 = por %p107, %p108
      %p110 = scmp.ne.s32.totalorder %s102, %s104
      %p111 = scmp.eq.s32.totalorder %s26, 1
      %p112 = por %p110, %p111
      %p113 = scmp.ne.s32.totalorder %s104, %s105
      %p114 = scmp.eq.s32.totalorder %s26, 0
      %p115 = por %p113, %p114
      %p116 = scmp.ne.s32.totalorder %s104, %s105
      %p117 = scmp.eq.s32.totalorder %s27, 1
      %p118 = por %p116, %p117
      %p120 = scmp.ne.s32.totalorder %s105, %s119
      %p121 = scmp.eq.s32.totalorder %s27, 0
      %p122 = por %p120, %p121
      %s124 = sadd.s32 %s123, 1
      %p127 = scmp.eq.s32.totalorder %s21, 1
      %p128 = scmp.ne.s32.totalorder %s123, %s125
      %p129 = scmp.eq.s32.totalorder %s21, 0
      %p130 = por %p128, %p129
      %p131 = scmp.ne.s32.totalorder %s123, %s125
      %p132 = scmp.eq.s32.totalorder %s26, 1
      %p133 = por %p131, %p132
      %p134 = scmp.ne.s32.totalorder %s125, %s126
      %p135 = scmp.eq.s32.totalorder %s26, 0
      %p136 = por %p134, %p135
      %p137 = scmp.ne.s32.totalorder %s125, %s126
      %p138 = scmp.eq.s32.totalorder %s27, 1
      %p139 = por %p137, %p138
      %p141 = scmp.ne.s32.totalorder %s126, %s140
      %p142 = scmp.eq.s32.totalorder %s27, 0
      %p143 = por %p141, %p142
      %s145 = sadd.s32 %s144, 1
      %p148 = scmp.eq.s32.totalorder %s21, 1
      %p149 = scmp.ne.s32.totalorder %s144, %s146
      %p150 = scmp.eq.s32.totalorder %s21, 0
      %p151 = por %p149, %p150
      %p152 = scmp.ne.s32.totalorder %s144, %s146
      %p153 = scmp.eq.s32.totalorder %s26, 1
      %p154 = por %p152, %p153
      %p155 = scmp.ne.s32.totalorder %s146, %s147
      %p156 = scmp.eq.s32.totalorder %s26, 0
      %p157 = por %p155, %p156
      %p158 = scmp.ne.s32.totalorder %s146, %s147
      %p159 = scmp.eq.s32.totalorder %s27, 1
      %p160 = por %p158, %p159
      %p162 = scmp.ne.s32.totalorder %s147, %s161
      %p163 = scmp.eq.s32.totalorder %s27, 0
      %p164 = por %p162, %p163
      %s166 = sadd.s32 %s165, 1
      %p169 = scmp.eq.s32.totalorder %s21, 1
      %p170 = scmp.ne.s32.totalorder %s165, %s167
      %p171 = scmp.eq.s32.totalorder %s21, 0
      %p172 = por %p170, %p171
      %p173 = scmp.ne.s32.totalorder %s165, %s167
      %p174 = scmp.eq.s32.totalorder %s26, 1
      %p175 = por %p173, %p174
      %p176 = scmp.ne.s32.totalorder %s167, %s168
      %p177 = scmp.eq.s32.totalorder %s26, 0
      %p178 = por %p176, %p177
      %p179 = scmp.ne.s32.totalorder %s167, %s168
      %p180 = scmp.eq.s32.totalorder %s27, 1
      %p181 = por %p179, %p180
      %p183 = scmp.ne.s32.totalorder %s168, %s182
      %p184 = scmp.eq.s32.totalorder %s27, 0
      %p185 = por %p183, %p184
      %s187 = sadd.s32 %s186, 1
      %p190 = scmp.eq.s32.totalorder %s21, 1
      %p191 = scmp.ne.s32.totalorder %s186, %s188
      %p192 = scmp.eq.s32.totalorder %s21, 0
      %p193 = por %p191, %p192
      %p194 = scmp.ne.s32.totalorder %s186, %s188
      %p195 = scmp.eq.s32.totalorder %s26, 1
      %p196 = por %p194, %p195
      %p197 = scmp.ne.s32.totalorder %s188, %s189
      %p198 = scmp.eq.s32.totalorder %s26, 0
      %p199 = por %p197, %p198
      %p200 = scmp.ne.s32.totalorder %s188, %s189
      %p201 = scmp.eq.s32.totalorder %s27, 1
      %p202 = por %p200, %p201
      %p204 = scmp.ne.s32.totalorder %s189, %s203
      %p205 = scmp.eq.s32.totalorder %s27, 0
      %p206 = por %p204, %p205
      %s208 = sadd.s32 %s207, 1
      %p211 = scmp.eq.s32.totalorder %s21, 1
      %p212 = scmp.ne.s32.totalorder %s207, %s209
      %p213 = scmp.eq.s32.totalorder %s21, 0
      %p214 = por %p212, %p213
      %p215 = scmp.ne.s32.totalorder %s207, %s209
      %p216 = scmp.eq.s32.totalorder %s26, 1
      %p217 = por %p215, %p216
      %p218 = scmp.ne.s32.totalorder %s209, %s210
      %p219 = scmp.eq.s32.totalorder %s26, 0
      %p220 = por %p218, %p219
      %p221 = scmp.ne.s32.totalorder %s209, %s210
      %p222 = scmp.eq.s32.totalorder %s27, 1
      %p223 = por %p221, %p222
      %p225 = scmp.ne.s32.totalorder %s210, %s224
      %p226 = scmp.eq.s32.totalorder %s27, 0
      %p227 = por %p225, %p226
      %s229 = sadd.s32 %s228, 1
      %p232 = scmp.eq.s32.totalorder %s21, 1
      %p233 = scmp.ne.s32.totalorder %s228, %s230
      %p234 = scmp.eq.s32.totalorder %s21, 0
      %p235 = por %p233, %p234
      %p236 = scmp.ne.s32.totalorder %s228, %s230
      %p237 = scmp.eq.s32.totalorder %s26, 1
      %p238 = por %p236, %p237
      %p239 = scmp.ne.s32.totalorder %s230, %s231
      %p240 = scmp.eq.s32.totalorder %s26, 0
      %p241 = por %p239, %p240
      %p242 = scmp.ne.s32.totalorder %s230, %s231
      %p243 = scmp.eq.s32.totalorder %s27, 1
      %p244 = por %p242, %p243
      %p246 = scmp.ne.s32.totalorder %s231, %s245
      %p247 = scmp.eq.s32.totalorder %s27, 0
      %p248 = por %p246, %p247
      %s250 = sadd.s32 %s249, 1
      %p253 = scmp.eq.s32.totalorder %s21, 1
      %p254 = scmp.ne.s32.totalorder %s249, %s251
      %p255 = scmp.eq.s32.totalorder %s21, 0
      %p256 = por %p254, %p255
      %p257 = scmp.ne.s32.totalorder %s249, %s251
      %p258 = scmp.eq.s32.totalorder %s26, 1
      %p259 = por %p257, %p258
      %p260 = scmp.ne.s32.totalorder %s251, %s252
      %p261 = scmp.eq.s32.totalorder %s26, 0
      %p262 = por %p260, %p261
      %p263 = scmp.ne.s32.totalorder %s251, %s252
      %p264 = scmp.eq.s32.totalorder %s27, 1
      %p265 = por %p263, %p264
      %p267 = scmp.ne.s32.totalorder %s252, %s266
      %p268 = scmp.eq.s32.totalorder %s27, 0
      %p269 = por %p267, %p268
      %s271 = sadd.s32 %s270, 1
      %p274 = scmp.eq.s32.totalorder %s21, 1
      %p275 = scmp.ne.s32.totalorder %s270, %s272
      %p276 = scmp.eq.s32.totalorder %s21, 0
      %p277 = por %p275, %p276
      %p278 = scmp.ne.s32.totalorder %s270, %s272
      %p279 = scmp.eq.s32.totalorder %s26, 1
      %p280 = por %p278, %p279
      %p281 = scmp.ne.s32.totalorder %s272, %s273
      %p282 = scmp.eq.s32.totalorder %s26, 0
      %p283 = por %p281, %p282
      %p284 = scmp.ne.s32.totalorder %s272, %s273
      %p285 = scmp.eq.s32.totalorder %s27, 1
      %p286 = por %p284, %p285
      %p288 = scmp.ne.s32.totalorder %s273, %s287
      %p289 = scmp.eq.s32.totalorder %s27, 0
      %p290 = por %p288, %p289
      %s291 = ssub.s32 %s21, %s28
      %p292 = scmp.eq.s32.totalorder %s291, 0
      %s294 = sadd.s32 %s293, 1
      %s295 = scalar_select %p292, %s293, %s294
      %p298 = pneg %p292
      %p299 = scmp.eq.s32.totalorder %s21, 1
      %p300 = por %p298, %p299
      %p301 = scmp.ne.s32.totalorder %s293, %s296
      %p302 = scmp.eq.s32.totalorder %s21, 0
      %p303 = por %p301, %p302
      %p304 = scmp.ne.s32.totalorder %s293, %s296
      %p305 = scmp.eq.s32.totalorder %s26, 1
      %p306 = por %p304, %p305
      %p307 = scmp.ne.s32.totalorder %s296, %s297
      %p308 = scmp.eq.s32.totalorder %s26, 0
      %p309 = por %p307, %p308
      %p310 = scmp.ne.s32.totalorder %s296, %s297
      %p311 = scmp.eq.s32.totalorder %s27, 1
      %p312 = por %p310, %p311
      %p314 = scmp.ne.s32.totalorder %s297, %s313
      %p315 = scmp.eq.s32.totalorder %s27, 0
      %p316 = por %p314, %p315
      %p317 = scmp.le.s32.totalorder 1, %s21
      %p318 = scmp.lt.s32.totalorder %s21, 3
      %p319 = pnand %p317, %p318
      %p320 = pneg %p319
      // Predicated region
      $region9: #{prefix_bert_forward.1} parent=5 // pred_check
        _
      $region10: #{prefix_bert_forward.1} parent=5 // pred_check_branch
        %322 = sbr.rel (%p319) target = $region12
      $region11: #{prefix_bert_forward.1} parent=5 // pred_region
        %s323 = ssub.s32 %s21, 1
        // Predicated region
        $region13: #{prefix_bert_forward.1} parent=11 // pred_check
          %p324 = pneg %p94
        $region14: #{prefix_bert_forward.1} parent=11 // pred_check_branch
          %326 = sbr.rel (%p324) target = $region16
        $region15: #{prefix_bert_forward.1} parent=11 // pred_region
          _
        $region16: #{prefix_bert_forward.1} parent=11 // pred_fallthru
          _
        // Predicated region
        $region17: #{prefix_bert_forward.1} parent=11 // pred_check
          %p327 = pneg %p115
        $region18: #{prefix_bert_forward.1} parent=11 // pred_check_branch
          %329 = sbr.rel (%p327) target = $region20
        $region19: #{prefix_bert_forward.1} parent=11 // pred_region
          _
        $region20: #{prefix_bert_forward.1} parent=11 // pred_fallthru
          _
        // Predicated region
        $region21: #{prefix_bert_forward.1} parent=11 // pred_check
          %p330 = pneg %p136
        $region22: #{prefix_bert_forward.1} parent=11 // pred_check_branch
          %332 = sbr.rel (%p330) target = $region24
        $region23: #{prefix_bert_forward.1} parent=11 // pred_region
          _
        $region24: #{prefix_bert_forward.1} parent=11 // pred_fallthru
          _
        // Predicated region
        $region25: #{prefix_bert_forward.1} parent=11 // pred_check
          %p333 = pneg %p157
        $region26: #{prefix_bert_forward.1} parent=11 // pred_check_branch
          %335 = sbr.rel (%p333) target = $region28
        $region27: #{prefix_bert_forward.1} parent=11 // pred_region
          _
        $region28: #{prefix_bert_forward.1} parent=11 // pred_fallthru
          _
        // Predicated region
        $region29: #{prefix_bert_forward.1} parent=11 // pred_check
          %p336 = pneg %p178
        $region30: #{prefix_bert_forward.1} parent=11 // pred_check_branch
          %338 = sbr.rel (%p336) target = $region32
        $region31: #{prefix_bert_forward.1} parent=11 // pred_region
          _
        $region32: #{prefix_bert_forward.1} parent=11 // pred_fallthru
          _
        // Predicated region
        $region33: #{prefix_bert_forward.1} parent=11 // pred_check
          %p339 = pneg %p199
        $region34: #{prefix_bert_forward.1} parent=11 // pred_check_branch
          %341 = sbr.rel (%p339) target = $region36
        $region35: #{prefix_bert_forward.1} parent=11 // pred_region
          _
        $region36: #{prefix_bert_forward.1} parent=11 // pred_fallthru
          _
        // Predicated region
        $region37: #{prefix_bert_forward.1} parent=11 // pred_check
          %p342 = pneg %p220
        $region38: #{prefix_bert_forward.1} parent=11 // pred_check_branch
          %344 = sbr.rel (%p342) target = $region40
        $region39: #{prefix_bert_forward.1} parent=11 // pred_region
          _
        $region40: #{prefix_bert_forward.1} parent=11 // pred_fallthru
          _
        // Predicated region
        $region41: #{prefix_bert_forward.1} parent=11 // pred_check
          %p345 = pneg %p241
        $region42: #{prefix_bert_forward.1} parent=11 // pred_check_branch
          %347 = sbr.rel (%p345) target = $region44
        $region43: #{prefix_bert_forward.1} parent=11 // pred_region
          _
        $region44: #{prefix_bert_forward.1} parent=11 // pred_fallthru
          _
        // Predicated region
        $region45: #{prefix_bert_forward.1} parent=11 // pred_check
          %p348 = pneg %p262
        $region46: #{prefix_bert_forward.1} parent=11 // pred_check_branch
          %350 = sbr.rel (%p348) target = $region48
        $region47: #{prefix_bert_forward.1} parent=11 // pred_region
          _
        $region48: #{prefix_bert_forward.1} parent=11 // pred_fallthru
          _
        // Predicated region
        $region49: #{prefix_bert_forward.1} parent=11 // pred_check
          %p351 = pneg %p283
        $region50: #{prefix_bert_forward.1} parent=11 // pred_check_branch
          %353 = sbr.rel (%p351) target = $region52
        $region51: #{prefix_bert_forward.1} parent=11 // pred_region
          _
        $region52: #{prefix_bert_forward.1} parent=11 // pred_fallthru
          _
      $region12: #{prefix_bert_forward.1} parent=5 // pred_fallthru
        _
      %p354 = scmp.lt.s32.totalorder %s21, 2
      // Predicated region
      $region53: #{prefix_bert_forward.1} parent=5 // pred_check
        %p355 = pneg %p354
      $region54: #{prefix_bert_forward.1} parent=5 // pred_check_branch
        %357 = sbr.rel (%p355) target = $region56
      $region55: #{prefix_bert_forward.1} parent=5 // pred_region
        // Predicated region
        $region57: #{prefix_bert_forward.1} parent=55 // pred_check
          %p358 = pneg %p41
        $region58: #{prefix_bert_forward.1} parent=55 // pred_check_branch
          %360 = sbr.rel (%p358) target = $region60
        $region59: #{prefix_bert_forward.1} parent=55 // pred_region
          %p361 = scmp.lt.s32.totalorder %s21, 1
          %s362 = scalar_select %p361, %s21, 1
          %s363 = smul.addr %s362, 2
          %s364 = smul.addr %s363, 8
          %s365 = scalar_lea.vmem %s0, %s364
        $region60: #{prefix_bert_forward.1} parent=55 // pred_fallthru
          _
        // Predicated region
        $region61: #{prefix_bert_forward.1} parent=55 // pred_check
          %p366 = pneg %p67
        $region62: #{prefix_bert_forward.1} parent=55 // pred_check_branch
          %368 = sbr.rel (%p366) target = $region64
        $region63: #{prefix_bert_forward.1} parent=55 // pred_region
          %p369 = scmp.lt.s32.totalorder %s21, 1
          %s370 = scalar_select %p369, %s21, 1
          %s371 = scalar_lea.vmem %s1, %s370
        $region64: #{prefix_bert_forward.1} parent=55 // pred_fallthru
          _
      $region56: #{prefix_bert_forward.1} parent=5 // pred_fallthru
        _
      %p372 = scmp.le.s32.totalorder 1, %s21
      %p373 = scmp.lt.s32.totalorder %s21, 3
      %p374 = pnand %p372, %p373
      %p375 = pneg %p374
      // Predicated region
      $region65: #{prefix_bert_forward.1} parent=5 // pred_check
        _
      $region66: #{prefix_bert_forward.1} parent=5 // pred_check_branch
        %377 = sbr.rel (%p374) target = $region68
      $region67: #{prefix_bert_forward.1} parent=5 // pred_region
        %s378 = ssub.s32 %s21, 1
        %p379 = scmp.lt.s32.totalorder %s26, 1
        %s380 = scalar_select %p379, %s26, 1
        %s381 = smul.addr %s380, 2
        %s382 = smul.addr %s381, 8
        %s383 = scalar_lea.vmem %s0, %s382
        %p384 = pneg %p47
        %p385 = pneg %p44
        %p386 = scmp.lt.s32.totalorder %s26, 1
        %s387 = scalar_select %p386, %s26, 1
        %s388 = scalar_lea.vmem %s1, %s387
        %p389 = pneg %p73
        %p390 = pneg %p70
        %p391 = pneg %p94
        %p392 = pneg %p91
        %p393 = pneg %p115
        %p394 = pneg %p112
        %p395 = pneg %p136
        %p396 = pneg %p133
        %p397 = pneg %p157
        %p398 = pneg %p154
        %p399 = pneg %p178
        %p400 = pneg %p175
        %p401 = pneg %p199
        %p402 = pneg %p196
        %p403 = pneg %p220
        %p404 = pneg %p217
        %p405 = pneg %p241
        %p406 = pneg %p238
        %p407 = pneg %p262
        %p408 = pneg %p259
        %p409 = pneg %p283
        %p410 = pneg %p280
        %p411 = pneg %p309
        %p412 = pneg %p306
        %s413 = sand.u32 %s296, 1
        %s414 = scalar_lea.sflag [#allocation3], %s413
        %s415 = sand.u32 %s296, 1
        %s416 = scalar_lea.vmem [#allocation2], %s415
        %p417 = scmp.lt.s32.totalorder %s26, 1
        %s418 = scalar_select %p417, %s26, 1
        %s419 = smul.addr %s418, 2
        %s420 = smul.addr %s419, 8
        %s421 = scalar_lea.vmem %s0, %s420
        %p422 = scmp.lt.s32.totalorder %s26, 1
        %s423 = scalar_select %p422, %s26, 1
        %s424 = scalar_lea.vmem %s1, %s423
        %v426 = vld [vmem:[%s421] sm:$0xff]
        %v427 = vld [vmem:[%s421 + $0x8] sm:$0x1]
        %v428 = vld [vmem:[%s424] sm:$0x1]
        %v429 = vld [vmem:[%s2] sm:$0x1]
        %v430 = vld [vmem:[%s2 + $0x1] sm:$0x1]
        %vm431 = vcmask 261120
        %v432 = vsel %vm431, %v426, 0.0
        %433 = vadd.xlane.f32.xlu0 %v432
        %v434 = vpop.xlane.xlu0 %433
        %vm435 = vcmask 253952
        %v436 = vsel %vm435, %v427, 0.0
        %437 = vadd.xlane.f32.xlu0 %v436
        %v438 = vpop.xlane.xlu0 %437
        %v439 = vrcp.pop 32.0
        %v440 = vmul.f32 32.0, %v439
        %v441 = vsub.f32 1.0, %v440
        %v442 = vmul.f32 %v439, %v441
        %v443 = vadd.f32 %v439, %v442
        %vm444 = vweird.f32 %v439
        %v445 = vsel %vm444, %v439, %v443
        %v446 = vmul.f32 %v434, %v445
        %v447 = vmul.f32 %v438, %v445
        %v448 = vsub.f32 %v426, %v446
        %v449 = vsub.f32 %v427, %v447
        %v450 = vmul.f32 %v448, %v448
        %v451 = vmul.f32 %v449, %v449
        %v452 = vsel %vm431, %v450, 0.0
        %453 = vadd.xlane.f32.xlu0 %v452
        %v454 = vpop.xlane.xlu0 %453
        %v455 = vsel %vm435, %v451, 0.0
        %456 = vadd.xlane.f32.xlu0 %v455
        %v457 = vpop.xlane.xlu0 %456
        %v458 = vmul.f32 %v454, %v445
        %v459 = vmul.f32 %v457, %v445
        %v460 = vadd.f32 %v458, 1e-12
        %v461 = vadd.f32 %v459, 1e-12
        %v462 = vrsqrt.pop %v460
        %v463 = vmul.f32 %v462, %v460
        %v464 = vmul.f32 %v463, %v462
        %v465 = vmul.f32 0.5, %v464
        %v466 = vsub.f32 1.5, %v465
        %v467 = vmul.f32 %v462, %v466
        %vm468 = vweird.f32 %v460
        %vm469 = vweird.f32 %v462
        %vm470 = vmor %vm468, %vm469
        %v471 = vsel %vm470, %v462, %v467
        %v472 = vrsqrt.pop %v461
        %v473 = vmul.f32 %v472, %v461
        %v474 = vmul.f32 %v473, %v472
        %v475 = vmul.f32 0.5, %v474
        %v476 = vsub.f32 1.5, %v475
        %v477 = vmul.f32 %v472, %v476
        %vm478 = vweird.f32 %v461
        %vm479 = vweird.f32 %v472
        %vm480 = vmor %vm478, %vm479
        %v481 = vsel %vm480, %v472, %v477
        %v482 = vmul.f32 %v448, %v471
        %v483 = vmul.f32 %v449, %v481
        %v484 = vperm.slane %v429, 0
        %v485 = vmul.f32 %v482, %v484
        %v486 = vmul.f32 %v483, %v484
        %v487 = vperm.slane %v430, 0
        %v488 = vadd.f32 %v485, %v487
        %v489 = vadd.f32 %v486, %v487
        %v490 = vld [vmem:[%s3] sm:$0xff]
        %v491 = vld [vmem:[%s3 + $0x8] sm:$0xff]
        %v492 = vld [vmem:[%s3 + $0x10] sm:$0xff]
        %v493 = vld [vmem:[%s3 + $0x18] sm:$0xff]
        %v494 = vpack.c.bf16 %v489, %v488
        %v495 = vpack.c.bf16 %v491, %v490
        %v496 = vpack.c.bf16 %v493, %v492
        %v497 = vld [vmem:[%s4] sm:$0x1]
        %v499 = vperm.slane %v497, 0
        %v502 = vsel %vm431, %v494, 0
        %504 = vmatpush.bf16.msra.mxu0 0
        %505 = vmatpush.bf16.msra.mxu0 0
        %506 = vmatpush.bf16.msra.mxu0 0
        %507 = vmatpush.bf16.msra.mxu0 0
        %508 = vmatpush.bf16.msra.mxu0 0
        %509 = vmatpush.bf16.msra.mxu0 0
        %510 = vmatpush.bf16.msra.mxu0 %v496
        %511 = vmatpush.bf16.msra.mxu0 %v495
        %512 = vmatmul.bf16.gmra.mxu0 %v502
        %v513 = vpop.f32.mrf.mxu0
        %v514 = vadd.f32 %v499, %v513
        %v515 = vpop.f32.mrf.mxu0
        %v516 = vadd.f32 %v499, %v515
        %517 = vdwg.mxu0
        %v518 = vld [vmem:[%s9] sm:$0x3f]
        %v519 = vpack.c.bf16 %v516, %v514
        %521 = vrot.lane.b32.xlu0 %v519, 96
        %v522 = vpop.permute.xlu0 %521
        %vm523 = vcmask 130048
        %v525 = vsel %vm523, %v519, 0
        %v528 = vsel %vm523, %v522, 0
        %530 = vmatpush.bf16.xpose.msra.mxu0 0
        %531 = vmatpush.bf16.xpose.msra.mxu0 0
        %532 = vmatpush.bf16.xpose.msra.mxu0 0
        %533 = vmatpush.bf16.xpose.msra.mxu0 0
        %534 = vmatpush.bf16.xpose.msra.mxu0 0
        %535 = vmatpush.bf16.xpose.msra.mxu0 0
        %536 = vmatpush.bf16.xpose.msra.mxu0 0
        %537 = vmatpush.bf16.xpose.msra.mxu0 %v528
        %538 = vmatmul.bf16.gmra.mxu0 %v525
        %v539 = vpop.f32.mrf.mxu0
        %v540 = vadd.f32 0.0, %v539
        %v541 = vpop.f32.mrf.mxu0
        %v542 = vadd.f32 0.0, %v541
        %543 = vdwg.mxu0
        %v544 = vmul.f32 %v540, 0.25
        %v545 = vmul.f32 %v542, 0.25
        %v547 = vperm.slane %v428, 0
        %v549 = vadd.f32 %v544, %v547
        %v550 = vadd.f32 %v545, %v547
        %vm551 = vcmask 72704
        %v552 = vsel %vm551, %v549, -inf
        %553 = vmax.xlane.f32.xlu0 %v552
        %v554 = vpop.xlane.xlu0 %553
        %vm555 = vcmask 65536
        %v556 = vsel %vm555, %v550, -inf
        %557 = vmax.xlane.f32.xlu0 %v556
        %v558 = vpop.xlane.xlu0 %557
        %v559 = vsub.f32 %v549, %v554
        %v560 = vsub.f32 %v550, %v558
        %v561 = vmul.f32 %v559, 1.442695
        %v562 = vpow.pop %v561
        %v563 = vmul.f32 %v560, 1.442695
        %v564 = vpow.pop %v563
        %v565 = vsel %vm551, %v562, 0.0
        %566 = vadd.xlane.f32.xlu0 %v565
        %v567 = vpop.xlane.xlu0 %566
        %v568 = vsel %vm555, %v564, 0.0
        %569 = vadd.xlane.f32.xlu0 %v568
        %v570 = vpop.xlane.xlu0 %569
        %v571 = vrcp.pop %v567
        %v572 = vrcp.pop %v570
        %v573 = vmul.f32 %v562, %v571
        %v574 = vmul.f32 %v564, %v572
        %v575 = vpack.c.bf16 %v574, %v573
        %576 = vrot.lane.b32.xlu0 %v519, 64
        %v577 = vpop.permute.xlu0 %576
        %v579 = vsel %vm551, %v575, 0
        %vm581 = vcmask 1043456
        %vm582 = vcmask 1044480
        %v583 = vsel %vm581, 4294967295, 65535
        %v584 = vsel %vm582, %v583, 0
        %v586 = vand.u32 %v577, %v584
        %588 = vmatpush.bf16.msra.mxu0 0
        %589 = vmatpush.bf16.msra.mxu0 0
        %590 = vmatpush.bf16.msra.mxu0 0
        %591 = vmatpush.bf16.msra.mxu0 0
        %592 = vmatpush.bf16.msra.mxu0 0
        %593 = vmatpush.bf16.msra.mxu0 0
        %594 = vmatpush.bf16.msra.mxu0 0
        %595 = vmatpush.bf16.msra.mxu0 %v586
        %596 = vmatmul.bf16.gmra.mxu0 %v579
        %v597 = vpop.f32.mrf.mxu0
        %v598 = vadd.f32 0.0, %v597
        %v599 = vpop.f32.mrf.mxu0
        %v600 = vadd.f32 0.0, %v599
        %601 = vdwg.mxu0
        %602 = vrot.lane.b32.xlu0 %v519, 112
        %v603 = vpop.permute.xlu0 %602
        %604 = vrot.lane.b32.xlu0 %v519, 80
        %v605 = vpop.permute.xlu0 %604
        %v607 = vsel %vm523, %v603, 0
        %v610 = vsel %vm523, %v605, 0
        %612 = vmatpush.bf16.xpose.msra.mxu0 0
        %613 = vmatpush.bf16.xpose.msra.mxu0 0
        %614 = vmatpush.bf16.xpose.msra.mxu0 0
        %615 = vmatpush.bf16.xpose.msra.mxu0 0
        %616 = vmatpush.bf16.xpose.msra.mxu0 0
        %617 = vmatpush.bf16.xpose.msra.mxu0 0
        %618 = vmatpush.bf16.xpose.msra.mxu0 0
        %619 = vmatpush.bf16.xpose.msra.mxu0 %v610
        %620 = vmatmul.bf16.gmra.mxu0 %v607
        %v621 = vpop.f32.mrf.mxu0
        %v622 = vadd.f32 0.0, %v621
        %v623 = vpop.f32.mrf.mxu0
        %v624 = vadd.f32 0.0, %v623
        %625 = vdwg.mxu0
        %v626 = vmul.f32 %v622, 0.25
        %v627 = vmul.f32 %v624, 0.25
        %v628 = vadd.f32 %v626, %v547
        %v629 = vadd.f32 %v627, %v547
        %v630 = vsel %vm551, %v628, -inf
        %631 = vmax.xlane.f32.xlu0 %v630
        %v632 = vpop.xlane.xlu0 %631
        %v633 = vsel %vm555, %v629, -inf
        %634 = vmax.xlane.f32.xlu0 %v633
        %v635 = vpop.xlane.xlu0 %634
        %v636 = vsub.f32 %v628, %v632
        %v637 = vsub.f32 %v629, %v635
        %v638 = vmul.f32 %v636, 1.442695
        %v639 = vpow.pop %v638
        %v640 = vmul.f32 %v637, 1.442695
        %v641 = vpow.pop %v640
        %v642 = vsel %vm551, %v639, 0.0
        %643 = vadd.xlane.f32.xlu0 %v642
        %v644 = vpop.xlane.xlu0 %643
        %v645 = vsel %vm555, %v641, 0.0
        %646 = vadd.xlane.f32.xlu0 %v645
        %v647 = vpop.xlane.xlu0 %646
        %v648 = vrcp.pop %v644
        %v649 = vrcp.pop %v647
        %v650 = vmul.f32 %v639, %v648
        %v651 = vmul.f32 %v641, %v649
        %v652 = vpack.c.bf16 %v651, %v650
        %653 = vrot.lane.b32.xlu0 %v519, 48
        %v654 = vpop.permute.xlu0 %653
        %v656 = vsel %vm551, %v652, 0
        %v659 = vand.u32 %v654, %v584
        %661 = vmatpush.bf16.msra.mxu0 0
        %662 = vmatpush.bf16.msra.mxu0 0
        %663 = vmatpush.bf16.msra.mxu0 0
        %664 = vmatpush.bf16.msra.mxu0 0
        %665 = vmatpush.bf16.msra.mxu0 0
        %666 = vmatpush.bf16.msra.mxu0 0
        %667 = vmatpush.bf16.msra.mxu0 0
        %668 = vmatpush.bf16.msra.mxu0 %v659
        %669 = vmatmul.bf16.gmra.mxu0 %v656
        %v670 = vpop.f32.mrf.mxu0
        %v671 = vadd.f32 0.0, %v670
        %v672 = vpop.f32.mrf.mxu0
        %v673 = vadd.f32 0.0, %v672
        %674 = vdwg.mxu0
        %677 = vrot.lane.b32.xlu0 %v671, 16
        %v678 = vpop.permute.xlu0 %677
        %679 = vrot.lane.b32.xlu0 %v673, 16
        %v680 = vpop.permute.xlu0 %679
        %v683 = vsel %vm523, %v598, %v678
        %v684 = vsel %vm523, %v600, %v680
        %v685 = vld [vmem:[%s5] sm:$0xff]
        %v686 = vld [vmem:[%s5 + $0x8] sm:$0xff]
        %v687 = vld [vmem:[%s5 + $0x10] sm:$0xff]
        %v688 = vld [vmem:[%s5 + $0x18] sm:$0xff]
        %v689 = vpack.c.bf16 %v684, %v683
        %v690 = vpack.c.bf16 %v686, %v685
        %v691 = vpack.c.bf16 %v688, %v687
        %v692 = vperm.slane %v518, 0
        %v694 = vsel %vm431, %v689, 0
        %696 = vmatpush.bf16.msra.mxu0 0
        %697 = vmatpush.bf16.msra.mxu0 0
        %698 = vmatpush.bf16.msra.mxu0 0
        %699 = vmatpush.bf16.msra.mxu0 0
        %700 = vmatpush.bf16.msra.mxu0 0
        %701 = vmatpush.bf16.msra.mxu0 0
        %702 = vmatpush.bf16.msra.mxu0 %v691
        %703 = vmatpush.bf16.msra.mxu0 %v690
        %704 = vmatmul.bf16.gmra.mxu0 %v694
        %v705 = vpop.f32.mrf.mxu0
        %v706 = vadd.f32 %v692, %v705
        %v707 = vpop.f32.mrf.mxu0
        %v708 = vadd.f32 %v692, %v707
        %709 = vdwg.mxu0
        %v710 = vadd.f32 %v706, %v488
        %v711 = vadd.f32 %v708, %v489
        %v712 = vsel %vm431, %v710, 0.0
        %713 = vadd.xlane.f32.xlu0 %v712
        %v714 = vpop.xlane.xlu0 %713
        %v715 = vsel %vm435, %v711, 0.0
        %716 = vadd.xlane.f32.xlu0 %v715
        %v717 = vpop.xlane.xlu0 %716
        %v718 = vmul.f32 %v714, %v445
        %v719 = vmul.f32 %v717, %v445
        %v720 = vsub.f32 %v710, %v718
        %v721 = vsub.f32 %v711, %v719
        %v722 = vmul.f32 %v720, %v720
        %v723 = vmul.f32 %v721, %v721
        %v724 = vsel %vm431, %v722, 0.0
        %725 = vadd.xlane.f32.xlu0 %v724
        %v726 = vpop.xlane.xlu0 %725
        %v727 = vsel %vm435, %v723, 0.0
        %728 = vadd.xlane.f32.xlu0 %v727
        %v729 = vpop.xlane.xlu0 %728
        %v730 = vmul.f32 %v726, %v445
        %v731 = vmul.f32 %v729, %v445
        %v732 = vadd.f32 %v730, 1e-12
        %v733 = vadd.f32 %v731, 1e-12
        %v734 = vrsqrt.pop %v732
        %v735 = vmul.f32 %v734, %v732
        %v736 = vmul.f32 %v735, %v734
        %v737 = vmul.f32 0.5, %v736
        %v738 = vsub.f32 1.5, %v737
        %v739 = vmul.f32 %v734, %v738
        %vm740 = vweird.f32 %v732
        %vm741 = vweird.f32 %v734
        %vm742 = vmor %vm740, %vm741
        %v743 = vsel %vm742, %v734, %v739
        %v744 = vrsqrt.pop %v733
        %v745 = vmul.f32 %v744, %v733
        %v746 = vmul.f32 %v745, %v744
        %v747 = vmul.f32 0.5, %v746
        %v748 = vsub.f32 1.5, %v747
        %v749 = vmul.f32 %v744, %v748
        %vm750 = vweird.f32 %v733
        %vm751 = vweird.f32 %v744
        %vm752 = vmor %vm750, %vm751
        %v753 = vsel %vm752, %v744, %v749
        %v754 = vmul.f32 %v720, %v743
        %v755 = vmul.f32 %v721, %v753
        %v756 = vperm.slane %v518, 1
        %v757 = vmul.f32 %v754, %v756
        %v758 = vmul.f32 %v755, %v756
        %v759 = vperm.slane %v518, 2
        %v760 = vadd.f32 %v757, %v759
        %v761 = vadd.f32 %v758, %v759
        %v762 = vld [vmem:[%s6] sm:$0xff]
        %v763 = vld [vmem:[%s6 + $0x8] sm:$0xff]
        %v764 = vld [vmem:[%s6 + $0x10] sm:$0xff]
        %v765 = vld [vmem:[%s6 + $0x18] sm:$0xff]
        %v766 = vpack.c.bf16 %v761, %v760
        %v767 = vpack.c.bf16 %v763, %v762
        %v768 = vpack.c.bf16 %v765, %v764
        %v769 = vld [vmem:[%s7] sm:$0x1]
        %v771 = vperm.slane %v769, 0
        %v774 = vsel %vm431, %v766, 0
        %776 = vmatpush.bf16.msra.mxu0 0
        %777 = vmatpush.bf16.msra.mxu0 0
        %778 = vmatpush.bf16.msra.mxu0 0
        %779 = vmatpush.bf16.msra.mxu0 0
        %780 = vmatpush.bf16.msra.mxu0 0
        %781 = vmatpush.bf16.msra.mxu0 0
        %782 = vmatpush.bf16.msra.mxu0 %v768
        %783 = vmatpush.bf16.msra.mxu0 %v767
        %784 = vmatmul.bf16.gmra.mxu0 %v774
        %v785 = vpop.f32.mrf.mxu0
        %v786 = vadd.f32 %v771, %v785
        %v787 = vpop.f32.mrf.mxu0
        %v788 = vadd.f32 %v771, %v787
        %789 = vdwg.mxu0
        %v790 = vmul.f32 %v786, 0.5
        %v791 = vmul.f32 %v788, 0.5
        %v792 = vmul.f32 %v786, 0.044715
        %v793 = vmul.f32 %v788, 0.044715
        %v794 = vmul.f32 %v792, %v786
        %v795 = vmul.f32 %v793, %v788
        %v796 = vmul.f32 %v794, %v786
        %v797 = vmul.f32 %v795, %v788
        %v798 = vadd.f32 %v786, %v796
        %v799 = vadd.f32 %v788, %v797
        %v800 = vmul.f32 %v798, 0.7978846
        %v801 = vmul.f32 %v799, 0.7978846
        %v802 = vtanh.pop %v800
        %v803 = vtanh.pop %v801
        %v804 = vadd.f32 %v802, 1.0
        %v805 = vadd.f32 %v803, 1.0
        %v806 = vmul.f32 %v790, %v804
        %v807 = vmul.f32 %v791, %v805
        %v808 = vld [vmem:[%s8] sm:$0xff]
        %v809 = vld [vmem:[%s8 + $0x8] sm:$0xff]
        %v810 = vld [vmem:[%s8 + $0x10] sm:$0xff]
        %v811 = vld [vmem:[%s8 + $0x18] sm:$0xff]
        %v812 = vld [vmem:[%s8 + $0x20] sm:$0xff]
        %v813 = vld [vmem:[%s8 + $0x28] sm:$0xff]
        %v814 = vld [vmem:[%s8 + $0x30] sm:$0xff]
        %v815 = vld [vmem:[%s8 + $0x38] sm:$0xff]
        %v816 = vpack.c.bf16 %v807, %v806
        %v817 = vpack.c.bf16 %v809, %v808
        %v818 = vpack.c.bf16 %v811, %v810
        %v819 = vpack.c.bf16 %v813, %v812
        %v820 = vpack.c.bf16 %v815, %v814
        %v821 = vperm.slane %v518, 3
        %vm822 = vcmask 523264
        %v824 = vsel %vm822, %v816, 0
        %826 = vmatpush.bf16.msra.mxu0 0
        %827 = vmatpush.bf16.msra.mxu0 0
        %828 = vmatpush.bf16.msra.mxu0 0
        %829 = vmatpush.bf16.msra.mxu0 0
        %830 = vmatpush.bf16.msra.mxu0 %v820
        %831 = vmatpush.bf16.msra.mxu0 %v819
        %832 = vmatpush.bf16.msra.mxu0 %v818
        %833 = vmatpush.bf16.msra.mxu0 %v817
        %834 = vmatmul.bf16.gmra.mxu0 %v824
        %v835 = vpop.f32.mrf.mxu0
        %v836 = vadd.f32 %v821, %v835
        %v837 = vpop.f32.mrf.mxu0
        %v838 = vadd.f32 %v821, %v837
        %839 = vdwg.mxu0
        %v840 = vadd.f32 %v836, %v760
        %v841 = vadd.f32 %v838, %v761
        %v842 = vsel %vm431, %v840, 0.0
        %843 = vadd.xlane.f32.xlu0 %v842
        %v844 = vpop.xlane.xlu0 %843
        %v845 = vsel %vm435, %v841, 0.0
        %846 = vadd.xlane.f32.xlu0 %v845
        %v847 = vpop.xlane.xlu0 %846
        %v848 = vmul.f32 %v844, %v445
        %v849 = vmul.f32 %v847, %v445
        %v850 = vsub.f32 %v840, %v848
        %v851 = vsub.f32 %v841, %v849
        %v852 = vmul.f32 %v850, %v850
        %v853 = vmul.f32 %v851, %v851
        %v854 = vsel %vm431, %v852, 0.0
        %855 = vadd.xlane.f32.xlu0 %v854
        %v856 = vpop.xlane.xlu0 %855
        %v857 = vsel %vm435, %v853, 0.0
        %858 = vadd.xlane.f32.xlu0 %v857
        %v859 = vpop.xlane.xlu0 %858
        %v860 = vmul.f32 %v856, %v445
        %v861 = vmul.f32 %v859, %v445
        %v862 = vadd.f32 %v860, 1e-12
        %v863 = vadd.f32 %v861, 1e-12
        %v864 = vrsqrt.pop %v862
        %v865 = vmul.f32 %v864, %v862
        %v866 = vmul.f32 %v865, %v864
        %v867 = vmul.f32 0.5, %v866
        %v868 = vsub.f32 1.5, %v867
        %v869 = vmul.f32 %v864, %v868
        %vm870 = vweird.f32 %v862
        %vm871 = vweird.f32 %v864
        %vm872 = vmor %vm870, %vm871
        %v873 = vsel %vm872, %v864, %v869
        %v874 = vrsqrt.pop %v863
        %v875 = vmul.f32 %v874, %v863
        %v876 = vmul.f32 %v875, %v874
        %v877 = vmul.f32 0.5, %v876
        %v878 = vsub.f32 1.5, %v877
        %v879 = vmul.f32 %v874, %v878
        %vm880 = vweird.f32 %v863
        %vm881 = vweird.f32 %v874
        %vm882 = vmor %vm880, %vm881
        %v883 = vsel %vm882, %v874, %v879
        %v884 = vmul.f32 %v850, %v873
        %v885 = vmul.f32 %v851, %v883
        %v886 = vperm.slane %v518, 4
        %v887 = vmul.f32 %v884, %v886
        %v888 = vmul.f32 %v885, %v886
        %v889 = vperm.slane %v518, 5
        %v890 = vadd.f32 %v887, %v889
        %v891 = vadd.f32 %v888, %v889
        %s892 = scalar_lea.vmem %s3, 32
        %v893 = vld [vmem:[%s892] sm:$0xff]
        %v894 = vld [vmem:[%s892 + $0x8] sm:$0xff]
        %v895 = vld [vmem:[%s892 + $0x10] sm:$0xff]
        %v896 = vld [vmem:[%s892 + $0x18] sm:$0xff]
        %v897 = vpack.c.bf16 %v891, %v890
        %v898 = vpack.c.bf16 %v894, %v893
        %v899 = vpack.c.bf16 %v896, %v895
        %s900 = scalar_lea.vmem %s4, 1
        %v901 = vld [vmem:[%s900] sm:$0x1]
        %v903 = vperm.slane %v901, 0
        %v906 = vsel %vm431, %v897, 0
        %908 = vmatpush.bf16.msra.mxu0 0
        %909 = vmatpush.bf16.msra.mxu0 0
        %910 = vmatpush.bf16.msra.mxu0 0
        %911 = vmatpush.bf16.msra.mxu0 0
        %912 = vmatpush.bf16.msra.mxu0 0
        %913 = vmatpush.bf16.msra.mxu0 0
        %914 = vmatpush.bf16.msra.mxu0 %v899
        %915 = vmatpush.bf16.msra.mxu0 %v898
        %916 = vmatmul.bf16.gmra.mxu0 %v906
        %v917 = vpop.f32.mrf.mxu0
        %v918 = vadd.f32 %v903, %v917
        %v919 = vpop.f32.mrf.mxu0
        %v920 = vadd.f32 %v903, %v919
        %921 = vdwg.mxu0
        %s922 = scalar_lea.vmem %s9, 8
        %v923 = vld [vmem:[%s922] sm:$0x3f]
        %v924 = vpack.c.bf16 %v920, %v918
        %926 = vrot.lane.b32.xlu0 %v924, 96
        %v927 = vpop.permute.xlu0 %926
        %v929 = vsel %vm523, %v924, 0
        %v932 = vsel %vm523, %v927, 0
        %934 = vmatpush.bf16.xpose.msra.mxu0 0
        %935 = vmatpush.bf16.xpose.msra.mxu0 0
        %936 = vmatpush.bf16.xpose.msra.mxu0 0
        %937 = vmatpush.bf16.xpose.msra.mxu0 0
        %938 = vmatpush.bf16.xpose.msra.mxu0 0
        %939 = vmatpush.bf16.xpose.msra.mxu0 0
        %940 = vmatpush.bf16.xpose.msra.mxu0 0
        %941 = vmatpush.bf16.xpose.msra.mxu0 %v932
        %942 = vmatmul.bf16.gmra.mxu0 %v929
        %v943 = vpop.f32.mrf.mxu0
        %v944 = vadd.f32 0.0, %v943
        %v945 = vpop.f32.mrf.mxu0
        %v946 = vadd.f32 0.0, %v945
        %947 = vdwg.mxu0
        %v948 = vmul.f32 %v944, 0.25
        %v949 = vmul.f32 %v946, 0.25
        %v950 = vadd.f32 %v948, %v547
        %v951 = vadd.f32 %v949, %v547
        %v952 = vsel %vm551, %v950, -inf
        %953 = vmax.xlane.f32.xlu0 %v952
        %v954 = vpop.xlane.xlu0 %953
        %v955 = vsel %vm555, %v951, -inf
        %956 = vmax.xlane.f32.xlu0 %v955
        %v957 = vpop.xlane.xlu0 %956
        %v958 = vsub.f32 %v950, %v954
        %v959 = vsub.f32 %v951, %v957
        %v960 = vmul.f32 %v958, 1.442695
        %v961 = vpow.pop %v960
        %v962 = vmul.f32 %v959, 1.442695
        %v963 = vpow.pop %v962
        %v964 = vsel %vm551, %v961, 0.0
        %965 = vadd.xlane.f32.xlu0 %v964
        %v966 = vpop.xlane.xlu0 %965
        %v967 = vsel %vm555, %v963, 0.0
        %968 = vadd.xlane.f32.xlu0 %v967
        %v969 = vpop.xlane.xlu0 %968
        %v970 = vrcp.pop %v966
        %v971 = vrcp.pop %v969
        %v972 = vmul.f32 %v961, %v970
        %v973 = vmul.f32 %v963, %v971
        %v974 = vpack.c.bf16 %v973, %v972
        %975 = vrot.lane.b32.xlu0 %v924, 64
        %v976 = vpop.permute.xlu0 %975
        %v978 = vsel %vm551, %v974, 0
        %v981 = vand.u32 %v976, %v584
        %983 = vmatpush.bf16.msra.mxu0 0
        %984 = vmatpush.bf16.msra.mxu0 0
        %985 = vmatpush.bf16.msra.mxu0 0
        %986 = vmatpush.bf16.msra.mxu0 0
        %987 = vmatpush.bf16.msra.mxu0 0
        %988 = vmatpush.bf16.msra.mxu0 0
        %989 = vmatpush.bf16.msra.mxu0 0
        %990 = vmatpush.bf16.msra.mxu0 %v981
        %991 = vmatmul.bf16.gmra.mxu0 %v978
        %v992 = vpop.f32.mrf.mxu0
        %v993 = vadd.f32 0.0, %v992
        %v994 = vpop.f32.mrf.mxu0
        %v995 = vadd.f32 0.0, %v994
        %996 = vdwg.mxu0
        %997 = vrot.lane.b32.xlu0 %v924, 112
        %v998 = vpop.permute.xlu0 %997
        %999 = vrot.lane.b32.xlu0 %v924, 80
        %v1000 = vpop.permute.xlu0 %999
        %v1002 = vsel %vm523, %v998, 0
        %v1005 = vsel %vm523, %v1000, 0
        %1007 = vmatpush.bf16.xpose.msra.mxu0 0
        %1008 = vmatpush.bf16.xpose.msra.mxu0 0
        %1009 = vmatpush.bf16.xpose.msra.mxu0 0
        %1010 = vmatpush.bf16.xpose.msra.mxu0 0
        %1011 = vmatpush.bf16.xpose.msra.mxu0 0
        %1012 = vmatpush.bf16.xpose.msra.mxu0 0
        %1013 = vmatpush.bf16.xpose.msra.mxu0 0
        %1014 = vmatpush.bf16.xpose.msra.mxu0 %v1005
        %1015 = vmatmul.bf16.gmra.mxu0 %v1002
        %v1016 = vpop.f32.mrf.mxu0
        %v1017 = vadd.f32 0.0, %v1016
        %v1018 = vpop.f32.mrf.mxu0
        %v1019 = vadd.f32 0.0, %v1018
        %1020 = vdwg.mxu0
        %v1021 = vmul.f32 %v1017, 0.25
        %v1022 = vmul.f32 %v1019, 0.25
        %v1023 = vadd.f32 %v1021, %v547
        %v1024 = vadd.f32 %v1022, %v547
        %v1025 = vsel %vm551, %v1023, -inf
        %1026 = vmax.xlane.f32.xlu0 %v1025
        %v1027 = vpop.xlane.xlu0 %1026
        %v1028 = vsel %vm555, %v1024, -inf
        %1029 = vmax.xlane.f32.xlu0 %v1028
        %v1030 = vpop.xlane.xlu0 %1029
        %v1031 = vsub.f32 %v1023, %v1027
        %v1032 = vsub.f32 %v1024, %v1030
        %v1033 = vmul.f32 %v1031, 1.442695
        %v1034 = vpow.pop %v1033
        %v1035 = vmul.f32 %v1032, 1.442695
        %v1036 = vpow.pop %v1035
        %v1037 = vsel %vm551, %v1034, 0.0
        %1038 = vadd.xlane.f32.xlu0 %v1037
        %v1039 = vpop.xlane.xlu0 %1038
        %v1040 = vsel %vm555, %v1036, 0.0
        %1041 = vadd.xlane.f32.xlu0 %v1040
        %v1042 = vpop.xlane.xlu0 %1041
        %v1043 = vrcp.pop %v1039
        %v1044 = vrcp.pop %v1042
        %v1045 = vmul.f32 %v1034, %v1043
        %v1046 = vmul.f32 %v1036, %v1044
        %v1047 = vpack.c.bf16 %v1046, %v1045
        %1048 = vrot.lane.b32.xlu0 %v924, 48
        %v1049 = vpop.permute.xlu0 %1048
        %v1051 = vsel %vm551, %v1047, 0
        %v1054 = vand.u32 %v1049, %v584
        %1056 = vmatpush.bf16.msra.mxu0 0
        %1057 = vmatpush.bf16.msra.mxu0 0
        %1058 = vmatpush.bf16.msra.mxu0 0
        %1059 = vmatpush.bf16.msra.mxu0 0
        %1060 = vmatpush.bf16.msra.mxu0 0
        %1061 = vmatpush.bf16.msra.mxu0 0
        %1062 = vmatpush.bf16.msra.mxu0 0
        %1063 = vmatpush.bf16.msra.mxu0 %v1054
        %1064 = vmatmul.bf16.gmra.mxu0 %v1051
        %v1065 = vpop.f32.mrf.mxu0
        %v1066 = vadd.f32 0.0, %v1065
        %v1067 = vpop.f32.mrf.mxu0
        %v1068 = vadd.f32 0.0, %v1067
        %1069 = vdwg.mxu0
        %1072 = vrot.lane.b32.xlu0 %v1066, 16
        %v1073 = vpop.permute.xlu0 %1072
        %1074 = vrot.lane.b32.xlu0 %v1068, 16
        %v1075 = vpop.permute.xlu0 %1074
        %v1078 = vsel %vm523, %v993, %v1073
        %v1079 = vsel %vm523, %v995, %v1075
        %s1080 = scalar_lea.vmem %s5, 32
        %v1081 = vld [vmem:[%s1080] sm:$0xff]
        %v1082 = vld [vmem:[%s1080 + $0x8] sm:$0xff]
        %v1083 = vld [vmem:[%s1080 + $0x10] sm:$0xff]
        %v1084 = vld [vmem:[%s1080 + $0x18] sm:$0xff]
        %v1085 = vpack.c.bf16 %v1079, %v1078
        %v1086 = vpack.c.bf16 %v1082, %v1081
        %v1087 = vpack.c.bf16 %v1084, %v1083
        %v1088 = vperm.slane %v923, 0
        %v1090 = vsel %vm431, %v1085, 0
        %1092 = vmatpush.bf16.msra.mxu0 0
        %1093 = vmatpush.bf16.msra.mxu0 0
        %1094 = vmatpush.bf16.msra.mxu0 0
        %1095 = vmatpush.bf16.msra.mxu0 0
        %1096 = vmatpush.bf16.msra.mxu0 0
        %1097 = vmatpush.bf16.msra.mxu0 0
        %1098 = vmatpush.bf16.msra.mxu0 %v1087
        %1099 = vmatpush.bf16.msra.mxu0 %v1086
        %1100 = vmatmul.bf16.gmra.mxu0 %v1090
        %v1101 = vpop.f32.mrf.mxu0
        %v1102 = vadd.f32 %v1088, %v1101
        %v1103 = vpop.f32.mrf.mxu0
        %v1104 = vadd.f32 %v1088, %v1103
        %1105 = vdwg.mxu0
        %v1106 = vadd.f32 %v1102, %v890
        %v1107 = vadd.f32 %v1104, %v891
        %v1108 = vsel %vm431, %v1106, 0.0
        %1109 = vadd.xlane.f32.xlu0 %v1108
        %v1110 = vpop.xlane.xlu0 %1109
        %v1111 = vsel %vm435, %v1107, 0.0
        %1112 = vadd.xlane.f32.xlu0 %v1111
        %v1113 = vpop.xlane.xlu0 %1112
        %v1114 = vmul.f32 %v1110, %v445
        %v1115 = vmul.f32 %v1113, %v445
        %v1116 = vsub.f32 %v1106, %v1114
        %v1117 = vsub.f32 %v1107, %v1115
        %v1118 = vmul.f32 %v1116, %v1116
        %v1119 = vmul.f32 %v1117, %v1117
        %v1120 = vsel %vm431, %v1118, 0.0
        %1121 = vadd.xlane.f32.xlu0 %v1120
        %v1122 = vpop.xlane.xlu0 %1121
        %v1123 = vsel %vm435, %v1119, 0.0
        %1124 = vadd.xlane.f32.xlu0 %v1123
        %v1125 = vpop.xlane.xlu0 %1124
        %v1126 = vmul.f32 %v1122, %v445
        %v1127 = vmul.f32 %v1125, %v445
        %v1128 = vadd.f32 %v1126, 1e-12
        %v1129 = vadd.f32 %v1127, 1e-12
        %v1130 = vrsqrt.pop %v1128
        %v1131 = vmul.f32 %v1130, %v1128
        %v1132 = vmul.f32 %v1131, %v1130
        %v1133 = vmul.f32 0.5, %v1132
        %v1134 = vsub.f32 1.5, %v1133
        %v1135 = vmul.f32 %v1130, %v1134
        %vm1136 = vweird.f32 %v1128
        %vm1137 = vweird.f32 %v1130
        %vm1138 = vmor %vm1136, %vm1137
        %v1139 = vsel %vm1138, %v1130, %v1135
        %v1140 = vrsqrt.pop %v1129
        %v1141 = vmul.f32 %v1140, %v1129
        %v1142 = vmul.f32 %v1141, %v1140
        %v1143 = vmul.f32 0.5, %v1142
        %v1144 = vsub.f32 1.5, %v1143
        %v1145 = vmul.f32 %v1140, %v1144
        %vm1146 = vweird.f32 %v1129
        %vm1147 = vweird.f32 %v1140
        %vm1148 = vmor %vm1146, %vm1147
        %v1149 = vsel %vm1148, %v1140, %v1145
        %v1150 = vmul.f32 %v1116, %v1139
        %v1151 = vmul.f32 %v1117, %v1149
        %v1152 = vperm.slane %v923, 1
        %v1153 = vmul.f32 %v1150, %v1152
        %v1154 = vmul.f32 %v1151, %v1152
        %v1155 = vperm.slane %v923, 2
        %v1156 = vadd.f32 %v1153, %v1155
        %v1157 = vadd.f32 %v1154, %v1155
        %s1158 = scalar_lea.vmem %s6, 32
        %v1159 = vld [vmem:[%s1158] sm:$0xff]
        %v1160 = vld [vmem:[%s1158 + $0x8] sm:$0xff]
        %v1161 = vld [vmem:[%s1158 + $0x10] sm:$0xff]
        %v1162 = vld [vmem:[%s1158 + $0x18] sm:$0xff]
        %v1163 = vpack.c.bf16 %v1157, %v1156
        %v1164 = vpack.c.bf16 %v1160, %v1159
        %v1165 = vpack.c.bf16 %v1162, %v1161
        %s1166 = scalar_lea.vmem %s7, 1
        %v1167 = vld [vmem:[%s1166] sm:$0x1]
        %v1169 = vperm.slane %v1167, 0
        %v1172 = vsel %vm431, %v1163, 0
        %1174 = vmatpush.bf16.msra.mxu0 0
        %1175 = vmatpush.bf16.msra.mxu0 0
        %1176 = vmatpush.bf16.msra.mxu0 0
        %1177 = vmatpush.bf16.msra.mxu0 0
        %1178 = vmatpush.bf16.msra.mxu0 0
        %1179 = vmatpush.bf16.msra.mxu0 0
        %1180 = vmatpush.bf16.msra.mxu0 %v1165
        %1181 = vmatpush.bf16.msra.mxu0 %v1164
        %1182 = vmatmul.bf16.gmra.mxu0 %v1172
        %v1183 = vpop.f32.mrf.mxu0
        %v1184 = vadd.f32 %v1169, %v1183
        %v1185 = vpop.f32.mrf.mxu0
        %v1186 = vadd.f32 %v1169, %v1185
        %1187 = vdwg.mxu0
        %v1188 = vmul.f32 %v1184, 0.5
        %v1189 = vmul.f32 %v1186, 0.5
        %v1190 = vmul.f32 %v1184, 0.044715
        %v1191 = vmul.f32 %v1186, 0.044715
        %v1192 = vmul.f32 %v1190, %v1184
        %v1193 = vmul.f32 %v1191, %v1186
        %v1194 = vmul.f32 %v1192, %v1184
        %v1195 = vmul.f32 %v1193, %v1186
        %v1196 = vadd.f32 %v1184, %v1194
        %v1197 = vadd.f32 %v1186, %v1195
        %v1198 = vmul.f32 %v1196, 0.7978846
        %v1199 = vmul.f32 %v1197, 0.7978846
        %v1200 = vtanh.pop %v1198
        %v1201 = vtanh.pop %v1199
        %v1202 = vadd.f32 %v1200, 1.0
        %v1203 = vadd.f32 %v1201, 1.0
        %v1204 = vmul.f32 %v1188, %v1202
        %v1205 = vmul.f32 %v1189, %v1203
        %s1206 = scalar_lea.vmem %s8, 64
        %v1207 = vld [vmem:[%s1206] sm:$0xff]
        %v1208 = vld [vmem:[%s1206 + $0x8] sm:$0xff]
        %v1209 = vld [vmem:[%s1206 + $0x10] sm:$0xff]
        %v1210 = vld [vmem:[%s1206 + $0x18] sm:$0xff]
        %v1211 = vld [vmem:[%s1206 + $0x20] sm:$0xff]
        %v1212 = vld [vmem:[%s1206 + $0x28] sm:$0xff]
        %v1213 = vld [vmem:[%s1206 + $0x30] sm:$0xff]
        %v1214 = vld [vmem:[%s1206 + $0x38] sm:$0xff]
        %v1215 = vpack.c.bf16 %v1205, %v1204
        %v1216 = vpack.c.bf16 %v1208, %v1207
        %v1217 = vpack.c.bf16 %v1210, %v1209
        %v1218 = vpack.c.bf16 %v1212, %v1211
        %v1219 = vpack.c.bf16 %v1214, %v1213
        %v1220 = vperm.slane %v923, 3
        %v1222 = vsel %vm822, %v1215, 0
        %1224 = vmatpush.bf16.msra.mxu0 0
        %1225 = vmatpush.bf16.msra.mxu0 0
        %1226 = vmatpush.bf16.msra.mxu0 0
        %1227 = vmatpush.bf16.msra.mxu0 0
        %1228 = vmatpush.bf16.msra.mxu0 %v1219
        %1229 = vmatpush.bf16.msra.mxu0 %v1218
        %1230 = vmatpush.bf16.msra.mxu0 %v1217
        %1231 = vmatpush.bf16.msra.mxu0 %v1216
        %1232 = vmatmul.bf16.gmra.mxu0 %v1222
        %v1233 = vpop.f32.mrf.mxu0
        %v1234 = vadd.f32 %v1220, %v1233
        %v1235 = vpop.f32.mrf.mxu0
        %1236 = vdwg.mxu0
        %v1237 = vadd.f32 %v1234, %v1156
        %v1238 = vsel %vm431, %v1237, 0.0
        %1239 = vadd.xlane.f32.xlu0 %v1238
        %v1240 = vpop.xlane.xlu0 %1239
        %v1241 = vmul.f32 %v1240, %v445
        %v1242 = vsub.f32 %v1237, %v1241
        %v1243 = vmul.f32 %v1242, %v1242
        %v1244 = vsel %vm431, %v1243, 0.0
        %1245 = vadd.xlane.f32.xlu0 %v1244
        %v1246 = vpop.xlane.xlu0 %1245
        %v1247 = vmul.f32 %v1246, %v445
        %v1248 = vadd.f32 %v1247, 1e-12
        %v1249 = vrsqrt.pop %v1248
        %v1250 = vmul.f32 %v1249, %v1248
        %v1251 = vmul.f32 %v1250, %v1249
        %v1252 = vmul.f32 0.5, %v1251
        %v1253 = vsub.f32 1.5, %v1252
        %v1254 = vmul.f32 %v1249, %v1253
        %vm1255 = vweird.f32 %v1248
        %vm1256 = vweird.f32 %v1249
        %vm1257 = vmor %vm1255, %vm1256
        %v1258 = vsel %vm1257, %v1249, %v1254
        %v1259 = vmul.f32 %v1242, %v1258
        %v1260 = vperm.slane %v923, 4
        %v1261 = vmul.f32 %v1259, %v1260
        %v1262 = vperm.slane %v923, 5
        %v1263 = vadd.f32 %v1261, %v1262
        %v1264 = vld [vmem:[%s11] sm:$0x1]
        %v1265 = vld [vmem:[%s10] sm:$0xff]
        %v1266 = vld [vmem:[%s10 + $0x8] sm:$0xff]
        %v1267 = vld [vmem:[%s10 + $0x10] sm:$0xff]
        %v1268 = vld [vmem:[%s10 + $0x18] sm:$0xff]
        %v1269 = vpack.c.bf16 %v1263, %v1263
        %v1270 = vpack.c.bf16 %v1266, %v1265
        %v1271 = vpack.c.bf16 %v1268, %v1267
        %v1273 = vsel %vm431, %v1269, 0
        %1275 = vmatpush.bf16.msra.mxu0 0
        %1276 = vmatpush.bf16.msra.mxu0 0
        %1277 = vmatpush.bf16.msra.mxu0 0
        %1278 = vmatpush.bf16.msra.mxu0 0
        %1279 = vmatpush.bf16.msra.mxu0 0
        %1280 = vmatpush.bf16.msra.mxu0 0
        %1281 = vmatpush.bf16.msra.mxu0 %v1271
        %1282 = vmatpush.bf16.msra.mxu0 %v1270
        %1283 = vmatmul.bf16.gmra.mxu0 %v1273
        %v1284 = vpop.f32.mrf.mxu0
        %v1285 = vadd.f32 0.0, %v1284
        %v1286 = vpop.f32.mrf.mxu0
        %1287 = vdwg.mxu0
        %v1288 = vadd.f32 %v1264, %v1285
        %s1289 = scalar_lea.vmem %s10, 32
        %v1290 = vld [vmem:[%s1289] sm:$0xff]
        %v1291 = vld [vmem:[%s1289 + $0x8] sm:$0xff]
        %v1292 = vld [vmem:[%s1289 + $0x10] sm:$0xff]
        %v1293 = vld [vmem:[%s1289 + $0x18] sm:$0xff]
        %v1294 = vpack.c.bf16 %v1291, %v1290
        %v1295 = vpack.c.bf16 %v1293, %v1292
        %v1296 = vshrl.u32 %v1269, 16
        %v1299 = vsel %vm431, %v1296, 0
        %1301 = vmatpush.bf16.msra.mxu0 0
        %1302 = vmatpush.bf16.msra.mxu0 0
        %1303 = vmatpush.bf16.msra.mxu0 0
        %1304 = vmatpush.bf16.msra.mxu0 0
        %1305 = vmatpush.bf16.msra.mxu0 0
        %1306 = vmatpush.bf16.msra.mxu0 0
        %1307 = vmatpush.bf16.msra.mxu0 %v1295
        %1308 = vmatpush.bf16.msra.mxu0 %v1294
        %1309 = vmatmul.bf16.gmra.mxu0 %v1299
        %v1310 = vpop.f32.mrf.mxu0
        %v1311 = vadd.f32 0.0, %v1310
        %v1312 = vpop.f32.mrf.mxu0
        %1313 = vdwg.mxu0
        %v1314 = vadd.f32 %v1288, %v1311
        %vm1315 = vcmask 8192
        %v1316 = vsel %vm1315, %v1314, -inf
        %1317 = vmax.xlane.f32.xlu0 %v1316
        %v1318 = vpop.xlane.xlu0 %1317
        %v1319 = vsub.f32 %v1314, %v1318
        %v1320 = vmul.f32 %v1319, 1.442695
        %v1321 = vpow.pop %v1320
        %v1322 = vsel %vm1315, %v1321, 0.0
        %1323 = vadd.xlane.f32.xlu0 %v1322
        %v1324 = vpop.xlane.xlu0 %1323
        %v1325 = vlog2.pop %v1324
        %v1326 = vmul.f32 %v1325, 0.6931472
        %v1327 = vadd.f32 %v1326, %v1318
        %v1328 = vsub.f32 %v1314, %v1327
        %1329 = vst.msk [vmem:[%s416] sm:$0x1] %vm1315, %v1328
        %s1330 = sand.u32 %s296, 1
        %s1331 = scalar_lea.sflag [#allocation3], %s1330
        %s1332 = sand.u32 %s296, 1
        %s1333 = scalar_lea.vmem [#allocation2], %s1332
        // Predicated region
        $region69: #{prefix_bert_forward.1} parent=67 // pred_check
          %p1334 = pneg %p306
        $region70: #{prefix_bert_forward.1} parent=67 // pred_check_branch
          %1336 = sbr.rel (%p1334) target = $region72
        $region71: #{prefix_bert_forward.1} parent=67 // pred_region
          %1338 = vsyncadd %s1331, 0
          %s1339 = scalar_lea.hbm %s12, %s26
          %s1341 = sshll.u32 %s1333, 4
          %s1342 = int_to_ptr.vmem [resolvable:$true] %s1341
          %s1343 = sshll.u32 %s1339, 4
          %s1344 = int_to_ptr.hbm [resolvable:$true] %s1343
          %1346 = dma.vmem_to_hbm [thread:$0]  %s1342, 16, %s1344, %s1331
        $region72: #{prefix_bert_forward.1} parent=67 // pred_fallthru
          _
      $region68: #{prefix_bert_forward.1} parent=5 // pred_fallthru
        _
      %p1347 = scmp.le.s32.totalorder 2, %s21
      // Predicated region
      $region73: #{prefix_bert_forward.1} parent=5 // pred_check
        %p1348 = pneg %p1347
      $region74: #{prefix_bert_forward.1} parent=5 // pred_check_branch
        %1350 = sbr.rel (%p1348) target = $region76
      $region75: #{prefix_bert_forward.1} parent=5 // pred_region
        %s1351 = ssub.s32 %s21, 2
        // Predicated region
        $region77: #{prefix_bert_forward.1} parent=75 // pred_check
          %p1352 = pneg %p312
        $region78: #{prefix_bert_forward.1} parent=75 // pred_check_branch
          %1354 = sbr.rel (%p1352) target = $region80
        $region79: #{prefix_bert_forward.1} parent=75 // pred_region
          %s1355 = sand.u32 %s297, 1
          %s1356 = scalar_lea.sflag [#allocation3], %s1355
          %s1357 = sand.u32 %s297, 1
          %s1358 = scalar_lea.vmem [#allocation2], %s1357
          %1360 = dma.done %s1356, 16
        $region80: #{prefix_bert_forward.1} parent=75 // pred_fallthru
          _
      $region76: #{prefix_bert_forward.1} parent=5 // pred_fallthru
        _
    $region6: #{prefix_bert_forward.1} parent=1 // loop_footer
      %s25 = sadd.s32 1, %s21
    $region7: #{prefix_bert_forward.1} parent=1 // loop_footer_branch
      %20 = sbr.rel target = $region3
    $region8: #{prefix_bert_forward.1} parent=1 // loop_exit
      _
    %1361 = vsyncpa [#allocation3], 1
    %s1362 = scalar_lea.sflag [#allocation3], 1
    %1363 = vsyncpa %s1362, 1

</llo_original>
